<compile_context>
chip_gen: v7x
topology: tpu7x:2x2x1
jax: 0.10.0
libtpu: 0.0.40
codegen_flags: <defaults>
</compile_context>

<pallas_src>
import functools

import jax
import jax.numpy as jnp
from jax.experimental import pallas as pl
from jax.experimental.pallas import tpu as pltpu


HIDDEN = 100          # hidden_layer_size (fixed by the module)
CONTEXT = 7           # context_window_size (fixed by the module)
NUM_LAYERS = 2
HP = 128              # hidden padded to one full lane tile
LP = 2 * HP           # bidirectional width, padded (two lane tiles)


# ----------------------------------------------------------------------------
# Fused Pallas kernel: 2-layer bi-RNN -> Conv1d+ReLU -> channel-max -> dense
# ----------------------------------------------------------------------------
def _rcnn_fused_kernel(x_ref, wih0_ref, b0_ref, wih1_ref, b1_ref, whh_ref,
                       wconv_ref, bconv_ref, wlin_ref, blin_ref, o_ref,
                       *, hidden, ctx):
    """Shapes (H=100 real hidden, HP=128 padded, LP=2*HP, N=max_len, K=ctx,
    O=out_size).  All padded weight/bias entries are exactly zero, so padded
    lanes stay zero through the whole network.

    x_ref:     (B, N, E)    f32  embedded input; time axis = B, RNN rows = N
    wih0_ref:  (E, LP)      bf16 layer-0 input proj, [fwd | bwd] on lanes
    b0_ref:    (1, LP)      f32  layer-0 b_ih+b_hh, [fwd | bwd], padded
    wih1_ref:  (LP, LP)     bf16 layer-1 input proj, rows=[out0_f|out0_b],
                                  cols=[fwd | bwd]
    b1_ref:    (1, LP)      f32  layer-1 b_ih+b_hh, [fwd | bwd], padded
    whh_ref:   (4, HP, HP)  bf16 hidden->hidden (transposed) [l0f,l0b,l1f,l1b]
    wconv_ref: (HP, K*N)    bf16 stacked-tap conv weight: [o, k*N+c]=w[o,c,k]
    bconv_ref: (HP, 1)      f32  conv bias (padded channels zero)
    wlin_ref:  (LP, O)      bf16 dense weight (transposed, rows>=2H zero)
    blin_ref:  (1, O)       f32  dense bias
    o_ref:     (B, O)       f32  output
    """
    B, N, E = x_ref.shape
    H = hidden
    K = ctx
    pad = K // 2
    hp = whh_ref.shape[1]
    lp = 2 * hp
    f32 = jnp.float32
    bf16 = jnp.bfloat16

    def mm(a, w):  # bf16 operands, f32 accumulation (native MXU path)
        return jnp.dot(a.astype(bf16), w, preferred_element_type=f32)

    def roll_lanes(v, s):
        # result[:, l] = v[:, (l - s) % width]  (static circular lane shift;
        # lowers to lane rotates/selects, stays off the MXU critical path).
        width = v.shape[1]
        s = s % width
        if s == 0:
            return v
        return jnp.concatenate([v[:, width - s:], v[:, :width - s]], axis=1)

    # Hoist all weight loads out of the unrolled loops.
    whh = [whh_ref[i] for i in range(4)]
    wih0 = wih0_ref[...]
    wih1 = wih1_ref[...]
    b0 = b0_ref[...]
    b1 = b1_ref[...]
    wconv = wconv_ref[...]
    bconv = bconv_ref[...]
    wlin = wlin_ref[...]
    blin = blin_ref[...]

    # ---- Layer-0 input projection: ONE batched matmul, biases folded in ----
    x2 = x_ref[...].reshape(B * N, E)
    proj0 = mm(x2, wih0) + b0                       # (B*N, LP)  [fwd | bwd]

    # ---- RNN layer 0: fwd & bwd chains interleaved (latency hiding) --------
    # Per-step work is only h @ W_hh + precomputed-projection + tanh.
    # TODO(synk): for large B (>~30) stage out0_f/out0_b in a VMEM scratch
    # instead of Python lists to bound vreg live ranges.
    out0_f = [None] * B
    out0_b = [None] * B
    hf = jnp.zeros((N, hp), f32)
    hb = jnp.zeros((N, hp), f32)
    for s in range(B):                              # static unroll over time
        tf, tb = s, B - 1 - s
        hf = jnp.tanh(proj0[tf * N:(tf + 1) * N, :hp] + mm(hf, whh[0]))
        hb = jnp.tanh(proj0[tb * N:(tb + 1) * N, hp:] + mm(hb, whh[1]))
        out0_f[tf] = hf
        out0_b[tb] = hb

    # ---- Layer-1 input projection: ONE batched matmul over all time steps --
    ofb = jnp.concatenate([jnp.concatenate(out0_f, axis=0),
                           jnp.concatenate(out0_b, axis=0)], axis=1)  # (B*N, LP)
    proj1 = mm(ofb, wih1) + b1                      # (B*N, LP)  [fwd | bwd]

    # ---- RNN layer 1: interleaved fwd/bwd recurrences -----------------------
    h1f = [None] * B
    h1b = [None] * B
    hf = jnp.zeros((N, hp), f32)
    hb = jnp.zeros((N, hp), f32)
    for s in range(B):
        tf, tb = s, B - 1 - s
        hf = jnp.tanh(proj1[tf * N:(tf + 1) * N, :hp] + mm(hf, whh[2]))
        hb = jnp.tanh(proj1[tb * N:(tb + 1) * N, hp:] + mm(hb, whh[3]))
        h1f[tf] = hf
        h1b[tb] = hb

    # ---- Conv1d(+bias+ReLU) as ONE stacked-tap matmul for the whole batch ---
    # Build the contiguous conv length axis per time step t (== conv batch):
    # lanes [0:H)=fwd, [H:2H)=bwd, [2H:LP)=0, batches concatenated along lanes.
    tail = jnp.zeros((N, lp - 2 * H), f32)
    pieces = []
    for t in range(B):
        pieces += [h1f[t][:, :H], h1b[t][:, :H], tail]
    y_all = jnp.concatenate(pieces, axis=1)         # (N, B*LP)
    # Tap k needs the activation shifted by (k - pad); the per-batch zero tail
    # [2H:LP) supplies the 'same'-padding halo, and any wrap lands only in
    # lanes >= 2H which are killed by the zero-padded dense rows below.
    conv_act = jnp.concatenate(
        [roll_lanes(y_all, pad - k) for k in range(K)], axis=0)   # (K*N, B*LP)
    acc = jnp.dot(wconv, conv_act.astype(bf16),
                  preferred_element_type=f32)        # (HP, B*LP)
    acc = jnp.maximum(acc + bconv, 0.0)              # bias + ReLU
    feat_row = jnp.max(acc, axis=0, keepdims=True)   # (1, B*LP) channel max

    # ---- Batched epilogue: one dense matmul + sigmoid + one store -----------
    feat = jnp.concatenate(
        [feat_row[:, b * lp:(b + 1) * lp] for b in range(B)], axis=0)  # (B, LP)
    z = mm(feat, wlin) + blin                        # (B, O)
    o_ref[...] = (1.0 / (1.0 + jnp.exp(-z))).astype(o_ref.dtype)


# ----------------------------------------------------------------------------
# Parameters (PyTorch layout) + wrappers
# ----------------------------------------------------------------------------
def init_params(key, vocab, emb_dim, max_len, output_size):
    ks = iter(jax.random.split(key, 64))

    def nrm(shape, scale=0.05):
        return scale * jax.random.normal(next(ks), shape, dtype=jnp.float32)

    emb = nrm((vocab, emb_dim), 0.1)
    # RNN params in PyTorch layout, order: (l0,fwd), (l0,bwd), (l1,fwd), (l1,bwd)
    rnn_params = []
    for layer in range(NUM_LAYERS):
        in_size = emb_dim if layer == 0 else 2 * HIDDEN
        for _ in range(2):
            w_ih = nrm((HIDDEN, in_size))
            w_hh = nrm((HIDDEN, HIDDEN))
            b_ih = nrm((HIDDEN,))
            b_hh = nrm((HIDDEN,))
            rnn_params.append((w_ih, w_hh, b_ih, b_hh))
    conv_w = nrm((HIDDEN, max_len, CONTEXT))         # (out_ch, in_ch=max_len, K)
    conv_b = nrm((HIDDEN,))
    lin_w = nrm((output_size, 2 * HIDDEN))
    lin_b = nrm((output_size,))
    return emb, rnn_params, (conv_w, conv_b), (lin_w, lin_b)


def _pad_cols(a, cols):
    return jnp.pad(a, ((0, 0), (0, cols - a.shape[1])))


def _pad_block(a, rows, cols):
    return jnp.pad(a, ((0, rows - a.shape[0]), (0, cols - a.shape[1])))


def forward(params, sentence):
    emb, rnn_params, (conv_w, conv_b), (lin_w, lin_b) = params
    # TODO(synk): embedding gather stays in plain JAX (data-dependent gather).
    x = emb[sentence].astype(jnp.float32)            # (B, max_len, E)
    B, N, _ = x.shape
    H = conv_w.shape[0]                              # 100
    K = conv_w.shape[2]                              # 7
    out_size = lin_w.shape[0]
    bf16 = jnp.bfloat16
    hpad = HP - H

    (wi0f, wh0f, bi0f, bh0f), (wi0b, wh0b, bi0b, bh0b), \
        (wi1f, wh1f, bi1f, bh1f), (wi1b, wh1b, bi1b, bh1b) = rnn_params

    # --- trace-time weight packing: transposed, H padded to HP=128, biases
    # combined and folded into the batched input projections, conv packed as a
    # single stacked-tap matrix, dense rows >= 2H zero-filled. ---------------
    wih0 = jnp.concatenate([_pad_cols(wi0f.T, HP), _pad_cols(wi0b.T, HP)],
                           axis=1).astype(bf16)                      # (E, LP)
    b0 = jnp.concatenate([jnp.pad(bi0f + bh0f, (0, hpad)),
                          jnp.pad(bi0b + bh0b, (0, hpad))]).reshape(1, LP)

    def blk(w):                                      # (H, H) -> (HP, HP)
        return _pad_block(w, HP, HP)

    # rows = [out0_fwd | out0_bwd] halves, cols = [layer1_fwd | layer1_bwd]
    wih1 = jnp.block([[blk(wi1f[:, :H].T), blk(wi1b[:, :H].T)],
                      [blk(wi1f[:, H:].T), blk(wi1b[:, H:].T)]]).astype(bf16)
    b1 = jnp.concatenate([jnp.pad(bi1f + bh1f, (0, hpad)),
                          jnp.pad(bi1b + bh1b, (0, hpad))]).reshape(1, LP)

    whh = jnp.stack([blk(wh0f.T), blk(wh0b.T), blk(wh1f.T), blk(wh1b.T)],
                    axis=0).astype(bf16)                             # (4, HP, HP)

    # conv: [o, k*N + c] = conv_w[o, c, k]; out channels padded 100 -> 128
    # (zero rows + zero bias: relu(0) never changes the channel max).
    wconv = jnp.transpose(conv_w, (0, 2, 1)).reshape(H, K * N)
    wconv = jnp.pad(wconv, ((0, hpad), (0, 0))).astype(bf16)         # (HP, K*N)
    bconv = jnp.pad(conv_b, (0, hpad)).reshape(HP, 1)

    # dense: rows [0:2H) real, [2H:LP) zero (kills padded/garbage feat lanes)
    wlin = jnp.pad(lin_w.T, ((0, LP - 2 * H), (0, 0))).astype(bf16)  # (LP, O)
    blin = lin_b.reshape(1, out_size)

    kernel = functools.partial(_rcnn_fused_kernel, hidden=H, ctx=K)
    # TODO(synk): in the full Siamese model, run both branches in one
    # pallas_call with a size-2 "parallel" grid axis to use v7x's 2nd core.
    return pl.pallas_call(
        kernel,
        out_shape=jax.ShapeDtypeStruct((B, out_size), jnp.float32),
        compiler_params=pltpu.CompilerParams(
            vmem_limit_bytes=32 * 1024 * 1024),
    )(x, wih0, b0, wih1, b1, whh, wconv, bconv, wlin, blin)


def forward_ref(params, sentence):
    """Pure-JAX f32 reference of the same math (sanity check)."""
    emb, rnn_params, (conv_w, conv_b), (lin_w, lin_b) = params
    x = emb[sentence].astype(jnp.float32)            # (B, max_len, E)
    B = x.shape[0]
    H = conv_w.shape[0]
    K = conv_w.shape[2]
    pad = K // 2

    def run_dir(inp, p, reverse):
        w_ih, w_hh, b_ih, b_hh = p
        h = jnp.zeros((inp.shape[1], w_hh.shape[0]), jnp.float32)
        outs = [None] * inp.shape[0]
        order = range(inp.shape[0] - 1, -1, -1) if reverse else range(inp.shape[0])
        for t in order:
            h = jnp.tanh(inp[t] @ w_ih.T + b_ih + h @ w_hh.T + b_hh)
            outs[t] = h
        return jnp.stack(outs, axis=0)

    def run_layer(inp, p_fwd, p_bwd):
        return jnp.concatenate([run_dir(inp, p_fwd, False),
                                run_dir(inp, p_bwd, True)], axis=-1)

    y0 = run_layer(x, rnn_params[0], rnn_params[1])      # (B, N, 2H)
    y1 = run_layer(y0, rnn_params[2], rnn_params[3])     # (B, N, 2H)

    L = y1.shape[2]
    xp = jnp.pad(y1, ((0, 0), (0, 0), (pad, pad)))       # pad conv length axis
    acc = jnp.zeros((B, H, L), jnp.float32)
    for k in range(K):
        acc = acc + jnp.einsum('on,bnl->bol', conv_w[:, :, k], xp[:, :, k:k + L])
    acc = jax.nn.relu(acc + conv_b[None, :, None])
    feat = jnp.max(acc, axis=1)                          # (B, 2H)
    return jax.nn.sigmoid(feat @ lin_w.T + lin_b[None, :])


# ----------------------------------------------------------------------------
if __name__ == "__main__":
    key = jax.random.PRNGKey(0)
    vocab, emb_dim, max_len, out_size, batch = 50, 50, 8, 4, 2

    pkey, skey = jax.random.split(key)
    params = init_params(pkey, vocab, emb_dim, max_len, out_size)
    sentence = jax.random.randint(skey, (batch, max_len), 0, vocab,
                                  dtype=jnp.int32)

    out = forward(params, sentence)
    out = jax.block_until_ready(out)

    assert out.shape == (batch, out_size), out.shape
    ref = forward_ref(params, sentence)
    max_diff = float(jnp.max(jnp.abs(out - ref)))
    assert max_diff < 2e-2, f"mismatch vs reference: {max_diff}"

    print("KERNEL_OK")
</pallas_src>

<mosaic_0001>
module attributes {stable_mosaic.version = 11 : i64} {
  func.func @_rcnn_fused_kernel(%arg0: memref<2x8x50xf32, #tpu.memory_space<vmem>>, %arg1: memref<50x256xbf16, #tpu.memory_space<vmem>>, %arg2: memref<1x256xf32, #tpu.memory_space<vmem>>, %arg3: memref<256x256xbf16, #tpu.memory_space<vmem>>, %arg4: memref<1x256xf32, #tpu.memory_space<vmem>>, %arg5: memref<4x128x128xbf16, #tpu.memory_space<vmem>>, %arg6: memref<128x56xbf16, #tpu.memory_space<vmem>>, %arg7: memref<128x1xf32, #tpu.memory_space<vmem>>, %arg8: memref<256x4xbf16, #tpu.memory_space<vmem>>, %arg9: memref<1x4xf32, #tpu.memory_space<vmem>>, %arg10: memref<2x4xf32, #tpu.memory_space<vmem>>) attributes {dimension_semantics = [], scalar_prefetch = 0 : i64, scratch_operands = 0 : i64, tpu.core_type = #tpu.core_type<tc>} {
    %c0 = arith.constant 0 : index
    %c0_0 = arith.constant 0 : index
    %c0_1 = arith.constant 0 : index
    %0 = vector.load %arg5[%c0, %c0_0, %c0_1] : memref<4x128x128xbf16, #tpu.memory_space<vmem>>, vector<1x128x128xbf16>
    %1 = vector.shape_cast %0 : vector<1x128x128xbf16> to vector<128x128xbf16>
    %c1 = arith.constant 1 : index
    %c0_2 = arith.constant 0 : index
    %c0_3 = arith.constant 0 : index
    %2 = vector.load %arg5[%c1, %c0_2, %c0_3] : memref<4x128x128xbf16, #tpu.memory_space<vmem>>, vector<1x128x128xbf16>
    %3 = vector.shape_cast %2 : vector<1x128x128xbf16> to vector<128x128xbf16>
    %c2 = arith.constant 2 : index
    %c0_4 = arith.constant 0 : index
    %c0_5 = arith.constant 0 : index
    %4 = vector.load %arg5[%c2, %c0_4, %c0_5] : memref<4x128x128xbf16, #tpu.memory_space<vmem>>, vector<1x128x128xbf16>
    %5 = vector.shape_cast %4 : vector<1x128x128xbf16> to vector<128x128xbf16>
    %c3 = arith.constant 3 : index
    %c0_6 = arith.constant 0 : index
    %c0_7 = arith.constant 0 : index
    %6 = vector.load %arg5[%c3, %c0_6, %c0_7] : memref<4x128x128xbf16, #tpu.memory_space<vmem>>, vector<1x128x128xbf16>
    %7 = vector.shape_cast %6 : vector<1x128x128xbf16> to vector<128x128xbf16>
    %c0_8 = arith.constant 0 : index
    %c0_9 = arith.constant 0 : index
    %8 = vector.load %arg1[%c0_8, %c0_9] : memref<50x256xbf16, #tpu.memory_space<vmem>>, vector<50x256xbf16>
    %c0_10 = arith.constant 0 : index
    %c0_11 = arith.constant 0 : index
    %9 = vector.load %arg3[%c0_10, %c0_11] : memref<256x256xbf16, #tpu.memory_space<vmem>>, vector<256x256xbf16>
    %c0_12 = arith.constant 0 : index
    %c0_13 = arith.constant 0 : index
    %10 = vector.load %arg2[%c0_12, %c0_13] : memref<1x256xf32, #tpu.memory_space<vmem>>, vector<1x256xf32>
    %c0_14 = arith.constant 0 : index
    %c0_15 = arith.constant 0 : index
    %11 = vector.load %arg4[%c0_14, %c0_15] : memref<1x256xf32, #tpu.memory_space<vmem>>, vector<1x256xf32>
    %c0_16 = arith.constant 0 : index
    %c0_17 = arith.constant 0 : index
    %12 = vector.load %arg6[%c0_16, %c0_17] : memref<128x56xbf16, #tpu.memory_space<vmem>>, vector<128x56xbf16>
    %c0_18 = arith.constant 0 : index
    %c0_19 = arith.constant 0 : index
    %13 = vector.load %arg7[%c0_18, %c0_19] : memref<128x1xf32, #tpu.memory_space<vmem>>, vector<128x1xf32>
    %c0_20 = arith.constant 0 : index
    %c0_21 = arith.constant 0 : index
    %14 = vector.load %arg8[%c0_20, %c0_21] : memref<256x4xbf16, #tpu.memory_space<vmem>>, vector<256x4xbf16>
    %c0_22 = arith.constant 0 : index
    %c0_23 = arith.constant 0 : index
    %15 = vector.load %arg9[%c0_22, %c0_23] : memref<1x4xf32, #tpu.memory_space<vmem>>, vector<1x4xf32>
    %c0_24 = arith.constant 0 : index
    %c0_25 = arith.constant 0 : index
    %c0_26 = arith.constant 0 : index
    %16 = vector.load %arg0[%c0_24, %c0_25, %c0_26] : memref<2x8x50xf32, #tpu.memory_space<vmem>>, vector<2x8x50xf32>
    %17 = vector.shape_cast %16 : vector<2x8x50xf32> to vector<16x50xf32>
    %18 = arith.truncf %17 : vector<16x50xf32> to vector<16x50xbf16>
    %cst = arith.constant dense<0.000000e+00> : vector<16x256xf32>
    %19 = tpu.matmul %18, %8, %cst {dimension_numbers = #tpu.dot_dimension_numbers<[1], [0], [0], [1], [0, 0, 1, 1], [], []>} : vector<16x50xbf16>, vector<50x256xbf16>, vector<16x256xf32> -> vector<16x256xf32>
    %20 = vector.broadcast %10 : vector<1x256xf32> to vector<16x256xf32>
    %21 = arith.addf %19, %20 : vector<16x256xf32>
    %cst_27 = arith.constant 0.000000e+00 : f32
    %22 = vector.broadcast %cst_27 : f32 to vector<8x128xf32>
    %cst_28 = arith.constant 0.000000e+00 : f32
    %23 = vector.broadcast %cst_28 : f32 to vector<8x128xf32>
    %24 = vector.extract_strided_slice %21 {offsets = [0, 0], sizes = [8, 128], strides = [1, 1]} : vector<16x256xf32> to vector<8x128xf32>
    %25 = arith.truncf %22 : vector<8x128xf32> to vector<8x128xbf16>
    %cst_29 = arith.constant dense<0.000000e+00> : vector<8x128xf32>
    %26 = tpu.matmul %25, %1, %cst_29 {dimension_numbers = #tpu.dot_dimension_numbers<[1], [0], [0], [1], [0, 0, 1, 1], [], []>} : vector<8x128xbf16>, vector<128x128xbf16>, vector<8x128xf32> -> vector<8x128xf32>
    %27 = arith.addf %24, %26 : vector<8x128xf32>
    %28 = math.tanh %27 : vector<8x128xf32>
    %29 = vector.extract_strided_slice %21 {offsets = [8, 128], sizes = [8, 128], strides = [1, 1]} : vector<16x256xf32> to vector<8x128xf32>
    %30 = arith.truncf %23 : vector<8x128xf32> to vector<8x128xbf16>
    %cst_30 = arith.constant dense<0.000000e+00> : vector<8x128xf32>
    %31 = tpu.matmul %30, %3, %cst_30 {dimension_numbers = #tpu.dot_dimension_numbers<[1], [0], [0], [1], [0, 0, 1, 1], [], []>} : vector<8x128xbf16>, vector<128x128xbf16>, vector<8x128xf32> -> vector<8x128xf32>
    %32 = arith.addf %29, %31 : vector<8x128xf32>
    %33 = math.tanh %32 : vector<8x128xf32>
    %34 = vector.extract_strided_slice %21 {offsets = [8, 0], sizes = [8, 128], strides = [1, 1]} : vector<16x256xf32> to vector<8x128xf32>
    %35 = arith.truncf %28 : vector<8x128xf32> to vector<8x128xbf16>
    %cst_31 = arith.constant dense<0.000000e+00> : vector<8x128xf32>
    %36 = tpu.matmul %35, %1, %cst_31 {dimension_numbers = #tpu.dot_dimension_numbers<[1], [0], [0], [1], [0, 0, 1, 1], [], []>} : vector<8x128xbf16>, vector<128x128xbf16>, vector<8x128xf32> -> vector<8x128xf32>
    %37 = arith.addf %34, %36 : vector<8x128xf32>
    %38 = math.tanh %37 : vector<8x128xf32>
    %39 = vector.extract_strided_slice %21 {offsets = [0, 128], sizes = [8, 128], strides = [1, 1]} : vector<16x256xf32> to vector<8x128xf32>
    %40 = arith.truncf %33 : vector<8x128xf32> to vector<8x128xbf16>
    %cst_32 = arith.constant dense<0.000000e+00> : vector<8x128xf32>
    %41 = tpu.matmul %40, %3, %cst_32 {dimension_numbers = #tpu.dot_dimension_numbers<[1], [0], [0], [1], [0, 0, 1, 1], [], []>} : vector<8x128xbf16>, vector<128x128xbf16>, vector<8x128xf32> -> vector<8x128xf32>
    %42 = arith.addf %39, %41 : vector<8x128xf32>
    %43 = math.tanh %42 : vector<8x128xf32>
    %44 = tpu.concatenate %28, %38 in 0 : vector<8x128xf32>, vector<8x128xf32> -> vector<16x128xf32>
    %45 = tpu.concatenate %43, %33 in 0 : vector<8x128xf32>, vector<8x128xf32> -> vector<16x128xf32>
    %46 = tpu.concatenate %44, %45 in 1 : vector<16x128xf32>, vector<16x128xf32> -> vector<16x256xf32>
    %47 = arith.truncf %46 : vector<16x256xf32> to vector<16x256xbf16>
    %cst_33 = arith.constant dense<0.000000e+00> : vector<16x256xf32>
    %48 = tpu.matmul %47, %9, %cst_33 {dimension_numbers = #tpu.dot_dimension_numbers<[1], [0], [0], [1], [0, 0, 1, 1], [], []>} : vector<16x256xbf16>, vector<256x256xbf16>, vector<16x256xf32> -> vector<16x256xf32>
    %49 = vector.broadcast %11 : vector<1x256xf32> to vector<16x256xf32>
    %50 = arith.addf %48, %49 : vector<16x256xf32>
    %cst_34 = arith.constant 0.000000e+00 : f32
    %51 = vector.broadcast %cst_34 : f32 to vector<8x128xf32>
    %cst_35 = arith.constant 0.000000e+00 : f32
    %52 = vector.broadcast %cst_35 : f32 to vector<8x128xf32>
    %53 = vector.extract_strided_slice %50 {offsets = [0, 0], sizes = [8, 128], strides = [1, 1]} : vector<16x256xf32> to vector<8x128xf32>
    %54 = arith.truncf %51 : vector<8x128xf32> to vector<8x128xbf16>
    %cst_36 = arith.constant dense<0.000000e+00> : vector<8x128xf32>
    %55 = tpu.matmul %54, %5, %cst_36 {dimension_numbers = #tpu.dot_dimension_numbers<[1], [0], [0], [1], [0, 0, 1, 1], [], []>} : vector<8x128xbf16>, vector<128x128xbf16>, vector<8x128xf32> -> vector<8x128xf32>
    %56 = arith.addf %53, %55 : vector<8x128xf32>
    %57 = math.tanh %56 : vector<8x128xf32>
    %58 = vector.extract_strided_slice %50 {offsets = [8, 128], sizes = [8, 128], strides = [1, 1]} : vector<16x256xf32> to vector<8x128xf32>
    %59 = arith.truncf %52 : vector<8x128xf32> to vector<8x128xbf16>
    %cst_37 = arith.constant dense<0.000000e+00> : vector<8x128xf32>
    %60 = tpu.matmul %59, %7, %cst_37 {dimension_numbers = #tpu.dot_dimension_numbers<[1], [0], [0], [1], [0, 0, 1, 1], [], []>} : vector<8x128xbf16>, vector<128x128xbf16>, vector<8x128xf32> -> vector<8x128xf32>
    %61 = arith.addf %58, %60 : vector<8x128xf32>
    %62 = math.tanh %61 : vector<8x128xf32>
    %63 = vector.extract_strided_slice %50 {offsets = [8, 0], sizes = [8, 128], strides = [1, 1]} : vector<16x256xf32> to vector<8x128xf32>
    %64 = arith.truncf %57 : vector<8x128xf32> to vector<8x128xbf16>
    %cst_38 = arith.constant dense<0.000000e+00> : vector<8x128xf32>
    %65 = tpu.matmul %64, %5, %cst_38 {dimension_numbers = #tpu.dot_dimension_numbers<[1], [0], [0], [1], [0, 0, 1, 1], [], []>} : vector<8x128xbf16>, vector<128x128xbf16>, vector<8x128xf32> -> vector<8x128xf32>
    %66 = arith.addf %63, %65 : vector<8x128xf32>
    %67 = math.tanh %66 : vector<8x128xf32>
    %68 = vector.extract_strided_slice %50 {offsets = [0, 128], sizes = [8, 128], strides = [1, 1]} : vector<16x256xf32> to vector<8x128xf32>
    %69 = arith.truncf %62 : vector<8x128xf32> to vector<8x128xbf16>
    %cst_39 = arith.constant dense<0.000000e+00> : vector<8x128xf32>
    %70 = tpu.matmul %69, %7, %cst_39 {dimension_numbers = #tpu.dot_dimension_numbers<[1], [0], [0], [1], [0, 0, 1, 1], [], []>} : vector<8x128xbf16>, vector<128x128xbf16>, vector<8x128xf32> -> vector<8x128xf32>
    %71 = arith.addf %68, %70 : vector<8x128xf32>
    %72 = math.tanh %71 : vector<8x128xf32>
    %cst_40 = arith.constant 0.000000e+00 : f32
    %73 = vector.broadcast %cst_40 : f32 to vector<8x56xf32>
    %74 = vector.extract_strided_slice %57 {offsets = [0, 0], sizes = [8, 100], strides = [1, 1]} : vector<8x128xf32> to vector<8x100xf32>
    %75 = vector.extract_strided_slice %72 {offsets = [0, 0], sizes = [8, 100], strides = [1, 1]} : vector<8x128xf32> to vector<8x100xf32>
    %76 = vector.extract_strided_slice %67 {offsets = [0, 0], sizes = [8, 100], strides = [1, 1]} : vector<8x128xf32> to vector<8x100xf32>
    %77 = vector.extract_strided_slice %62 {offsets = [0, 0], sizes = [8, 100], strides = [1, 1]} : vector<8x128xf32> to vector<8x100xf32>
    %78 = tpu.concatenate %74, %75, %73, %76, %77, %73 in 1 : vector<8x100xf32>, vector<8x100xf32>, vector<8x56xf32>, vector<8x100xf32>, vector<8x100xf32>, vector<8x56xf32> -> vector<8x512xf32>
    %79 = vector.extract_strided_slice %78 {offsets = [0, 509], sizes = [8, 3], strides = [1, 1]} : vector<8x512xf32> to vector<8x3xf32>
    %80 = vector.extract_strided_slice %78 {offsets = [0, 0], sizes = [8, 509], strides = [1, 1]} : vector<8x512xf32> to vector<8x509xf32>
    %81 = tpu.concatenate %79, %80 in 1 : vector<8x3xf32>, vector<8x509xf32> -> vector<8x512xf32>
    %82 = vector.extract_strided_slice %78 {offsets = [0, 510], sizes = [8, 2], strides = [1, 1]} : vector<8x512xf32> to vector<8x2xf32>
    %83 = vector.extract_strided_slice %78 {offsets = [0, 0], sizes = [8, 510], strides = [1, 1]} : vector<8x512xf32> to vector<8x510xf32>
    %84 = tpu.concatenate %82, %83 in 1 : vector<8x2xf32>, vector<8x510xf32> -> vector<8x512xf32>
    %85 = vector.extract_strided_slice %78 {offsets = [0, 511], sizes = [8, 1], strides = [1, 1]} : vector<8x512xf32> to vector<8x1xf32>
    %86 = vector.extract_strided_slice %78 {offsets = [0, 0], sizes = [8, 511], strides = [1, 1]} : vector<8x512xf32> to vector<8x511xf32>
    %87 = tpu.concatenate %85, %86 in 1 : vector<8x1xf32>, vector<8x511xf32> -> vector<8x512xf32>
    %88 = vector.extract_strided_slice %78 {offsets = [0, 1], sizes = [8, 511], strides = [1, 1]} : vector<8x512xf32> to vector<8x511xf32>
    %89 = vector.extract_strided_slice %78 {offsets = [0, 0], sizes = [8, 1], strides = [1, 1]} : vector<8x512xf32> to vector<8x1xf32>
    %90 = tpu.concatenate %88, %89 in 1 : vector<8x511xf32>, vector<8x1xf32> -> vector<8x512xf32>
    %91 = vector.extract_strided_slice %78 {offsets = [0, 2], sizes = [8, 510], strides = [1, 1]} : vector<8x512xf32> to vector<8x510xf32>
    %92 = vector.extract_strided_slice %78 {offsets = [0, 0], sizes = [8, 2], strides = [1, 1]} : vector<8x512xf32> to vector<8x2xf32>
    %93 = tpu.concatenate %91, %92 in 1 : vector<8x510xf32>, vector<8x2xf32> -> vector<8x512xf32>
    %94 = vector.extract_strided_slice %78 {offsets = [0, 3], sizes = [8, 509], strides = [1, 1]} : vector<8x512xf32> to vector<8x509xf32>
    %95 = vector.extract_strided_slice %78 {offsets = [0, 0], sizes = [8, 3], strides = [1, 1]} : vector<8x512xf32> to vector<8x3xf32>
    %96 = tpu.concatenate %94, %95 in 1 : vector<8x509xf32>, vector<8x3xf32> -> vector<8x512xf32>
    %97 = tpu.concatenate %81, %84, %87, %78, %90, %93, %96 in 0 : vector<8x512xf32>, vector<8x512xf32>, vector<8x512xf32>, vector<8x512xf32>, vector<8x512xf32>, vector<8x512xf32>, vector<8x512xf32> -> vector<56x512xf32>
    %98 = arith.truncf %97 : vector<56x512xf32> to vector<56x512xbf16>
    %cst_41 = arith.constant dense<0.000000e+00> : vector<128x512xf32>
    %99 = tpu.matmul %12, %98, %cst_41 {dimension_numbers = #tpu.dot_dimension_numbers<[1], [0], [0], [1], [0, 0, 1, 1], [], []>} : vector<128x56xbf16>, vector<56x512xbf16>, vector<128x512xf32> -> vector<128x512xf32>
    %100 = vector.broadcast %13 : vector<128x1xf32> to vector<128x512xf32>
    %101 = arith.addf %99, %100 : vector<128x512xf32>
    %cst_42 = arith.constant 0.000000e+00 : f32
    %102 = vector.broadcast %cst_42 : f32 to vector<128x512xf32>
    %103 = arith.maximumf %101, %102 : vector<128x512xf32>
    %cst_43 = arith.constant dense<0xFF800000> : vector<512xf32>
    %104 = vector.multi_reduction <maximumf>, %103, %cst_43 [0] : vector<128x512xf32> to vector<512xf32>
    %105 = vector.shape_cast %104 : vector<512xf32> to vector<1x512xf32>
    %106 = vector.extract_strided_slice %105 {offsets = [0, 0], sizes = [1, 256], strides = [1, 1]} : vector<1x512xf32> to vector<1x256xf32>
    %107 = vector.extract_strided_slice %105 {offsets = [0, 256], sizes = [1, 256], strides = [1, 1]} : vector<1x512xf32> to vector<1x256xf32>
    %108 = tpu.concatenate %106, %107 in 0 : vector<1x256xf32>, vector<1x256xf32> -> vector<2x256xf32>
    %109 = arith.truncf %108 : vector<2x256xf32> to vector<2x256xbf16>
    %cst_44 = arith.constant dense<0.000000e+00> : vector<2x4xf32>
    %110 = tpu.matmul %109, %14, %cst_44 {dimension_numbers = #tpu.dot_dimension_numbers<[1], [0], [0], [1], [0, 0, 1, 1], [], []>} : vector<2x256xbf16>, vector<256x4xbf16>, vector<2x4xf32> -> vector<2x4xf32>
    %111 = vector.broadcast %15 : vector<1x4xf32> to vector<2x4xf32>
    %112 = arith.addf %110, %111 : vector<2x4xf32>
    %cst_45 = arith.constant 0.000000e+00 : f32
    %113 = vector.broadcast %cst_45 : f32 to vector<2x4xf32>
    %114 = arith.subf %113, %112 : vector<2x4xf32>
    %115 = math.exp %114 : vector<2x4xf32>
    %cst_46 = arith.constant 1.000000e+00 : f32
    %116 = vector.broadcast %cst_46 : f32 to vector<2x4xf32>
    %117 = arith.addf %116, %115 : vector<2x4xf32>
    %cst_47 = arith.constant 1.000000e+00 : f32
    %118 = vector.broadcast %cst_47 : f32 to vector<2x4xf32>
    %119 = arith.divf %118, %117 : vector<2x4xf32>
    %c0_48 = arith.constant 0 : index
    %c0_49 = arith.constant 0 : index
    %120 = vector.load %arg10[%c0_48, %c0_49] : memref<2x4xf32, #tpu.memory_space<vmem>>, vector<2x4xf32>
    tpu.vector_store %arg10[%c0_48, %c0_49], %119 {strides = array<i32>} : memref<2x4xf32, #tpu.memory_space<vmem>>, vector<2x4xf32>,
    return
  }
}

</mosaic_0001>

<llo_original>
// kernel: tpu_custom_call.1
$region0: #{tpu_custom_call.1}
  #allocation0 [shape = 'u32[]', space=smem, size = 0x4, offset = 0x4, fixed_abs, tag = 'smem constant byte address 0x4 - core index']
  #allocation1 [shape = 'u32[144,128]{1,0:T(1,128)}', space=vmem, size = 0x12000, scoped, tag = 'internal scratch']
  %s0 = inlined_call_operand.vmem [shape: f32[2,8,50], index: 0, kind: input, shape index: {}]
  %s1 = inlined_call_operand.vmem [shape: bf16[50,256], index: 1, kind: input, shape index: {}]
  %s2 = inlined_call_operand.vmem [shape: f32[1,256], index: 2, kind: input, shape index: {}]
  %s3 = inlined_call_operand.vmem [shape: bf16[256,256], index: 3, kind: input, shape index: {}]
  %s4 = inlined_call_operand.vmem [shape: f32[1,256], index: 4, kind: input, shape index: {}]
  %s5 = inlined_call_operand.hbm [shape: bf16[4,128,128], index: 5, kind: input, shape index: {}]
  %s6 = inlined_call_operand.vmem [shape: bf16[128,56], index: 6, kind: input, shape index: {}]
  %s7 = inlined_call_operand.vmem [shape: f32[128,1], index: 7, kind: input, shape index: {}]
  %s8 = inlined_call_operand.vmem [shape: bf16[256,4], index: 8, kind: input, shape index: {}]
  %s9 = inlined_call_operand.vmem [shape: f32[1,4], index: 9, kind: input, shape index: {}]
  %s10 = inlined_call_operand.hbm [shape: f32[2,4], index: 10, kind: output, shape index: {}]
  %s11 = sld [smem:[#allocation0]]
  $region54: #{tpu_custom_call.1} parent=0
    _
  %s13 = ssub.s32 1, %s11
  %s14 = scalar_select 0, %s13, %s11
  $region1: #{tpu_custom_call.1} parent=0
    #allocation2 [shape = 'u8[131072]{0}', space=vmem, size = 0x20000, scoped, tag = 'input window, operand 5, single buffered']
    #allocation3 [shape = 's32[1]{0}', space=sflag, size = 0x4, scoped, tag = 'scoped memory for tpu_custom_call.1']
    #allocation4 [shape = 's32[1]{0}', space=sflag, size = 0x4, scoped, tag = 'scoped memory for tpu_custom_call.1']
    #allocation5 [shape = 'u8[1024]{0}', space=vmem, size = 0x400, scoped, tag = 'output window, operand 0, single buffered']
    %15 = vsyncpa [#allocation3], 0
    %16 = vsyncpa [#allocation4], 0
    // Predicated region
    $region2: #{tpu_custom_call.1} parent=1 // pred_check
      _
    $region3: #{tpu_custom_call.1} parent=1 // pred_check_branch
      %18 = sbr.rel (0) target = $region5
    $region4: #{tpu_custom_call.1} parent=1 // pred_region
      _
    $region5: #{tpu_custom_call.1} parent=1 // pred_fallthru
      _
    // Predicated region
    $region6: #{tpu_custom_call.1} parent=1 // pred_check
      _
    $region7: #{tpu_custom_call.1} parent=1 // pred_check_branch
      %20 = sbr.rel (0) target = $region9
    $region8: #{tpu_custom_call.1} parent=1 // pred_region
      _
    $region9: #{tpu_custom_call.1} parent=1 // pred_fallthru
      _
    // Predicated region
    $region10: #{tpu_custom_call.1} parent=1 // pred_check
      _
    $region11: #{tpu_custom_call.1} parent=1 // pred_check_branch
      %22 = sbr.rel (0) target = $region13
    $region12: #{tpu_custom_call.1} parent=1 // pred_region
      _
    $region13: #{tpu_custom_call.1} parent=1 // pred_fallthru
      _
    // Predicated region
    $region14: #{tpu_custom_call.1} parent=1 // pred_check
      _
    $region15: #{tpu_custom_call.1} parent=1 // pred_check_branch
      %24 = sbr.rel (0) target = $region17
    $region16: #{tpu_custom_call.1} parent=1 // pred_region
      _
    $region17: #{tpu_custom_call.1} parent=1 // pred_fallthru
      _
    // Predicated region
    $region18: #{tpu_custom_call.1} parent=1 // pred_check
      _
    $region19: #{tpu_custom_call.1} parent=1 // pred_check_branch
      %26 = sbr.rel (0) target = $region21
    $region20: #{tpu_custom_call.1} parent=1 // pred_region
      _
    $region21: #{tpu_custom_call.1} parent=1 // pred_fallthru
      _
    // Predicated region
    $region22: #{tpu_custom_call.1} parent=1 // pred_check
      _
    $region23: #{tpu_custom_call.1} parent=1 // pred_check_branch
      %28 = sbr.rel (0) target = $region25
    $region24: #{tpu_custom_call.1} parent=1 // pred_region
      %s30 = ssub.s32 4096, 4096
      %31 = vsyncadd [#allocation3], %s30
      %s32 = sshll.u32 [#allocation2], 4
      %s33 = int_to_ptr.vmem [resolvable:$true] %s32
      %38 = dma.hbm_to_vmem [thread:$0]  %s5, 4096, %s33, [#allocation3], 64, 64, 4
    $region25: #{tpu_custom_call.1} parent=1 // pred_fallthru
      _
    // Predicated region
    $region26: #{tpu_custom_call.1} parent=1 // pred_check
      _
    $region27: #{tpu_custom_call.1} parent=1 // pred_check_branch
      %40 = sbr.rel (0) target = $region29
    $region28: #{tpu_custom_call.1} parent=1 // pred_region
      _
    $region29: #{tpu_custom_call.1} parent=1 // pred_fallthru
      _
    // Predicated region
    $region30: #{tpu_custom_call.1} parent=1 // pred_check
      _
    $region31: #{tpu_custom_call.1} parent=1 // pred_check_branch
      %42 = sbr.rel (0) target = $region33
    $region32: #{tpu_custom_call.1} parent=1 // pred_region
      _
    $region33: #{tpu_custom_call.1} parent=1 // pred_fallthru
      _
    // Predicated region
    $region34: #{tpu_custom_call.1} parent=1 // pred_check
      _
    $region35: #{tpu_custom_call.1} parent=1 // pred_check_branch
      %44 = sbr.rel (0) target = $region37
    $region36: #{tpu_custom_call.1} parent=1 // pred_region
      _
    $region37: #{tpu_custom_call.1} parent=1 // pred_fallthru
      _
    // Predicated region
    $region38: #{tpu_custom_call.1} parent=1 // pred_check
      _
    $region39: #{tpu_custom_call.1} parent=1 // pred_check_branch
      %46 = sbr.rel (0) target = $region41
    $region40: #{tpu_custom_call.1} parent=1 // pred_region
      _
    $region41: #{tpu_custom_call.1} parent=1 // pred_fallthru
      _
    // Predicated region
    $region42: #{tpu_custom_call.1} parent=1 // pred_check
      _
    $region43: #{tpu_custom_call.1} parent=1 // pred_check_branch
      %48 = sbr.rel (0) target = $region45
    $region44: #{tpu_custom_call.1} parent=1 // pred_region
      %49 = dma.done [#allocation3], 4096
    $region45: #{tpu_custom_call.1} parent=1 // pred_fallthru
      _
    %v51 = vld [vmem:[#allocation2] sm:$0xf]
    %v52 = vld [vmem:[#allocation2 + $0x4] sm:$0xf]
    %v53 = vld [vmem:[#allocation2 + $0x8] sm:$0xf]
    %v54 = vld [vmem:[#allocation2 + $0xc] sm:$0xf]
    %v55 = vld [vmem:[#allocation2 + $0x10] sm:$0xf]
    %v56 = vld [vmem:[#allocation2 + $0x14] sm:$0xf]
    %v57 = vld [vmem:[#allocation2 + $0x18] sm:$0xf]
    %v58 = vld [vmem:[#allocation2 + $0x1c] sm:$0xf]
    %v59 = vld [vmem:[#allocation2 + $0x20] sm:$0xf]
    %v60 = vld [vmem:[#allocation2 + $0x24] sm:$0xf]
    %v61 = vld [vmem:[#allocation2 + $0x28] sm:$0xf]
    %v62 = vld [vmem:[#allocation2 + $0x2c] sm:$0xf]
    %v63 = vld [vmem:[#allocation2 + $0x30] sm:$0xf]
    %v64 = vld [vmem:[#allocation2 + $0x34] sm:$0xf]
    %v65 = vld [vmem:[#allocation2 + $0x38] sm:$0xf]
    %v66 = vld [vmem:[#allocation2 + $0x3c] sm:$0xf]
    %s67 = scalar_lea.vmem [#allocation2], 64
    %v68 = vld [vmem:[%s67] sm:$0xf]
    %v69 = vld [vmem:[%s67 + $0x4] sm:$0xf]
    %v70 = vld [vmem:[%s67 + $0x8] sm:$0xf]
    %v71 = vld [vmem:[%s67 + $0xc] sm:$0xf]
    %v72 = vld [vmem:[%s67 + $0x10] sm:$0xf]
    %v73 = vld [vmem:[%s67 + $0x14] sm:$0xf]
    %v74 = vld [vmem:[%s67 + $0x18] sm:$0xf]
    %v75 = vld [vmem:[%s67 + $0x1c] sm:$0xf]
    %v76 = vld [vmem:[%s67 + $0x20] sm:$0xf]
    %v77 = vld [vmem:[%s67 + $0x24] sm:$0xf]
    %v78 = vld [vmem:[%s67 + $0x28] sm:$0xf]
    %v79 = vld [vmem:[%s67 + $0x2c] sm:$0xf]
    %v80 = vld [vmem:[%s67 + $0x30] sm:$0xf]
    %v81 = vld [vmem:[%s67 + $0x34] sm:$0xf]
    %v82 = vld [vmem:[%s67 + $0x38] sm:$0xf]
    %v83 = vld [vmem:[%s67 + $0x3c] sm:$0xf]
    %s84 = scalar_lea.vmem [#allocation2], 128
    %v85 = vld [vmem:[%s84] sm:$0xf]
    %v86 = vld [vmem:[%s84 + $0x4] sm:$0xf]
    %v87 = vld [vmem:[%s84 + $0x8] sm:$0xf]
    %v88 = vld [vmem:[%s84 + $0xc] sm:$0xf]
    %v89 = vld [vmem:[%s84 + $0x10] sm:$0xf]
    %v90 = vld [vmem:[%s84 + $0x14] sm:$0xf]
    %v91 = vld [vmem:[%s84 + $0x18] sm:$0xf]
    %v92 = vld [vmem:[%s84 + $0x1c] sm:$0xf]
    %v93 = vld [vmem:[%s84 + $0x20] sm:$0xf]
    %v94 = vld [vmem:[%s84 + $0x24] sm:$0xf]
    %v95 = vld [vmem:[%s84 + $0x28] sm:$0xf]
    %v96 = vld [vmem:[%s84 + $0x2c] sm:$0xf]
    %v97 = vld [vmem:[%s84 + $0x30] sm:$0xf]
    %v98 = vld [vmem:[%s84 + $0x34] sm:$0xf]
    %v99 = vld [vmem:[%s84 + $0x38] sm:$0xf]
    %v100 = vld [vmem:[%s84 + $0x3c] sm:$0xf]
    %s101 = scalar_lea.vmem [#allocation2], 192
    %v102 = vld [vmem:[%s101] sm:$0xf]
    %v103 = vld [vmem:[%s101 + $0x4] sm:$0xf]
    %v104 = vld [vmem:[%s101 + $0x8] sm:$0xf]
    %v105 = vld [vmem:[%s101 + $0xc] sm:$0xf]
    %v106 = vld [vmem:[%s101 + $0x10] sm:$0xf]
    %v107 = vld [vmem:[%s101 + $0x14] sm:$0xf]
    %v108 = vld [vmem:[%s101 + $0x18] sm:$0xf]
    %v109 = vld [vmem:[%s101 + $0x1c] sm:$0xf]
    %v110 = vld [vmem:[%s101 + $0x20] sm:$0xf]
    %v111 = vld [vmem:[%s101 + $0x24] sm:$0xf]
    %v112 = vld [vmem:[%s101 + $0x28] sm:$0xf]
    %v113 = vld [vmem:[%s101 + $0x2c] sm:$0xf]
    %v114 = vld [vmem:[%s101 + $0x30] sm:$0xf]
    %v115 = vld [vmem:[%s101 + $0x34] sm:$0xf]
    %v116 = vld [vmem:[%s101 + $0x38] sm:$0xf]
    %v117 = vld [vmem:[%s101 + $0x3c] sm:$0xf]
    %v118 = vld [vmem:[%s1] sm:$0xff]
    %v119 = vld [vmem:[%s1 + $0x8] sm:$0xff]
    %v120 = vld [vmem:[%s1 + $0x10] sm:$0xff]
    %v121 = vld [vmem:[%s1 + $0x18] sm:$0xff]
    %v122 = vld [vmem:[%s1 + $0x20] sm:$0xff]
    %v123 = vld [vmem:[%s1 + $0x28] sm:$0xff]
    %v124 = vld [vmem:[%s1 + $0x30] sm:$0x11]
    %v125 = vld [vmem:[%s3] sm:$0xff]
    %v126 = vld [vmem:[%s3 + $0x8] sm:$0xff]
    %v127 = vld [vmem:[%s3 + $0x10] sm:$0xff]
    %v128 = vld [vmem:[%s3 + $0x18] sm:$0xff]
    %v129 = vld [vmem:[%s3 + $0x20] sm:$0xff]
    %v130 = vld [vmem:[%s3 + $0x28] sm:$0xff]
    %v131 = vld [vmem:[%s3 + $0x30] sm:$0xff]
    %v132 = vld [vmem:[%s3 + $0x38] sm:$0xff]
    %v133 = vld [vmem:[%s3 + $0x40] sm:$0xff]
    %v134 = vld [vmem:[%s3 + $0x48] sm:$0xff]
    %v135 = vld [vmem:[%s3 + $0x50] sm:$0xff]
    %v136 = vld [vmem:[%s3 + $0x58] sm:$0xff]
    %v137 = vld [vmem:[%s3 + $0x60] sm:$0xff]
    %v138 = vld [vmem:[%s3 + $0x68] sm:$0xff]
    %v139 = vld [vmem:[%s3 + $0x70] sm:$0xff]
    %v140 = vld [vmem:[%s3 + $0x78] sm:$0xff]
    %v141 = vld [vmem:[%s3 + $0x80] sm:$0xff]
    %v142 = vld [vmem:[%s3 + $0x88] sm:$0xff]
    %v143 = vld [vmem:[%s3 + $0x90] sm:$0xff]
    %v144 = vld [vmem:[%s3 + $0x98] sm:$0xff]
    %v145 = vld [vmem:[%s3 + $0xa0] sm:$0xff]
    %v146 = vld [vmem:[%s3 + $0xa8] sm:$0xff]
    %v147 = vld [vmem:[%s3 + $0xb0] sm:$0xff]
    %v148 = vld [vmem:[%s3 + $0xb8] sm:$0xff]
    %v149 = vld [vmem:[%s3 + $0xc0] sm:$0xff]
    %v150 = vld [vmem:[%s3 + $0xc8] sm:$0xff]
    %v151 = vld [vmem:[%s3 + $0xd0] sm:$0xff]
    %v152 = vld [vmem:[%s3 + $0xd8] sm:$0xff]
    %v153 = vld [vmem:[%s3 + $0xe0] sm:$0xff]
    %v154 = vld [vmem:[%s3 + $0xe8] sm:$0xff]
    %v155 = vld [vmem:[%s3 + $0xf0] sm:$0xff]
    %v156 = vld [vmem:[%s3 + $0xf8] sm:$0xff]
    %v157 = vld [vmem:[%s2] sm:$0x3]
    %v158 = vld [vmem:[%s4] sm:$0x3]
    %v159 = vld [vmem:[%s6] sm:$0xf]
    %v160 = vld [vmem:[%s6 + $0x4] sm:$0xf]
    %v161 = vld [vmem:[%s6 + $0x8] sm:$0xf]
    %v162 = vld [vmem:[%s6 + $0xc] sm:$0xf]
    %v163 = vld [vmem:[%s6 + $0x10] sm:$0xf]
    %v164 = vld [vmem:[%s6 + $0x14] sm:$0xf]
    %v165 = vld [vmem:[%s6 + $0x18] sm:$0xf]
    %v166 = vld [vmem:[%s6 + $0x1c] sm:$0xf]
    %v167 = vld [vmem:[%s6 + $0x20] sm:$0xf]
    %v168 = vld [vmem:[%s6 + $0x24] sm:$0xf]
    %v169 = vld [vmem:[%s6 + $0x28] sm:$0xf]
    %v170 = vld [vmem:[%s6 + $0x2c] sm:$0xf]
    %v171 = vld [vmem:[%s6 + $0x30] sm:$0xf]
    %v172 = vld [vmem:[%s6 + $0x34] sm:$0xf]
    %v173 = vld [vmem:[%s6 + $0x38] sm:$0xf]
    %v174 = vld [vmem:[%s6 + $0x3c] sm:$0xf]
    %v175 = vld [vmem:[%s7] sm:$0xff]
    %v176 = vld [vmem:[%s7 + $0x8] sm:$0xff]
    %v177 = vld [vmem:[%s7 + $0x10] sm:$0xff]
    %v178 = vld [vmem:[%s7 + $0x18] sm:$0xff]
    %v179 = vld [vmem:[%s7 + $0x20] sm:$0xff]
    %v180 = vld [vmem:[%s7 + $0x28] sm:$0xff]
    %v181 = vld [vmem:[%s7 + $0x30] sm:$0xff]
    %v182 = vld [vmem:[%s7 + $0x38] sm:$0xff]
    %v183 = vld [vmem:[%s7 + $0x40] sm:$0xff]
    %v184 = vld [vmem:[%s7 + $0x48] sm:$0xff]
    %v185 = vld [vmem:[%s7 + $0x50] sm:$0xff]
    %v186 = vld [vmem:[%s7 + $0x58] sm:$0xff]
    %v187 = vld [vmem:[%s7 + $0x60] sm:$0xff]
    %v188 = vld [vmem:[%s7 + $0x68] sm:$0xff]
    %v189 = vld [vmem:[%s7 + $0x70] sm:$0xff]
    %v190 = vld [vmem:[%s7 + $0x78] sm:$0xff]
    %v191 = vld [vmem:[%s8] sm:$0xf]
    %v192 = vld [vmem:[%s8 + $0x4] sm:$0xf]
    %v193 = vld [vmem:[%s8 + $0x8] sm:$0xf]
    %v194 = vld [vmem:[%s8 + $0xc] sm:$0xf]
    %v195 = vld [vmem:[%s8 + $0x10] sm:$0xf]
    %v196 = vld [vmem:[%s8 + $0x14] sm:$0xf]
    %v197 = vld [vmem:[%s8 + $0x18] sm:$0xf]
    %v198 = vld [vmem:[%s8 + $0x1c] sm:$0xf]
    %v199 = vld [vmem:[%s8 + $0x20] sm:$0xf]
    %v200 = vld [vmem:[%s8 + $0x24] sm:$0xf]
    %v201 = vld [vmem:[%s8 + $0x28] sm:$0xf]
    %v202 = vld [vmem:[%s8 + $0x2c] sm:$0xf]
    %v203 = vld [vmem:[%s8 + $0x30] sm:$0xf]
    %v204 = vld [vmem:[%s8 + $0x34] sm:$0xf]
    %v205 = vld [vmem:[%s8 + $0x38] sm:$0xf]
    %v206 = vld [vmem:[%s8 + $0x3c] sm:$0xf]
    %v207 = vld [vmem:[%s8 + $0x40] sm:$0xf]
    %v208 = vld [vmem:[%s8 + $0x44] sm:$0xf]
    %v209 = vld [vmem:[%s8 + $0x48] sm:$0xf]
    %v210 = vld [vmem:[%s8 + $0x4c] sm:$0xf]
    %v211 = vld [vmem:[%s8 + $0x50] sm:$0xf]
    %v212 = vld [vmem:[%s8 + $0x54] sm:$0xf]
    %v213 = vld [vmem:[%s8 + $0x58] sm:$0xf]
    %v214 = vld [vmem:[%s8 + $0x5c] sm:$0xf]
    %v215 = vld [vmem:[%s8 + $0x60] sm:$0xf]
    %v216 = vld [vmem:[%s8 + $0x64] sm:$0xf]
    %v217 = vld [vmem:[%s8 + $0x68] sm:$0xf]
    %v218 = vld [vmem:[%s8 + $0x6c] sm:$0xf]
    %v219 = vld [vmem:[%s8 + $0x70] sm:$0xf]
    %v220 = vld [vmem:[%s8 + $0x74] sm:$0xf]
    %v221 = vld [vmem:[%s8 + $0x78] sm:$0xf]
    %v222 = vld [vmem:[%s8 + $0x7c] sm:$0xf]
    %v223 = vld [vmem:[%s9] sm:$0x1]
    %v224 = vld [vmem:[%s0] sm:$0xff]
    %v225 = vld [vmem:[%s0 + $0x8] sm:$0xff]
    %v226 = vpack.c.bf16 %v225, %v224
    %v228 = vlaneseq
    %v229 = vshrl.u32 %v228, 7
    %v230 = vsub.s32 0, %v229
    %v231 = vrot.slane %v157, %v230
    %v232 = vlaneseq
    %v233 = vshrl.u32 %v232, 7
    %v234 = vsub.s32 1, %v233
    %v235 = vrot.slane %v157, %v234
    %v245 = vunpack.c.l.b16 %v118
    %v246 = vunpack.c.h.b16 %v118
    %v247 = vunpack.c.l.b16 %v119
    %v248 = vunpack.c.h.b16 %v119
    %v249 = vunpack.c.l.b16 %v120
    %v250 = vunpack.c.h.b16 %v120
    %v251 = vunpack.c.l.b16 %v121
    %v252 = vunpack.c.h.b16 %v121
    %v253 = vunpack.c.l.b16 %v122
    %v254 = vunpack.c.h.b16 %v122
    %v255 = vunpack.c.l.b16 %v123
    %v256 = vunpack.c.h.b16 %v123
    %v257 = vunpack.c.l.b16 %v124
    %v258 = vunpack.c.h.b16 %v124
    %v259 = vpack.c.b16 %v247, %v245
    %v260 = vpack.c.b16 %v248, %v246
    %v261 = vpack.c.b16 %v251, %v249
    %v262 = vpack.c.b16 %v252, %v250
    %v263 = vpack.c.b16 %v255, %v253
    %v264 = vpack.c.b16 %v256, %v254
    %v265 = vpack.c.b16 %v257, %v257
    %v266 = vpack.c.b16 %v258, %v258
    %vm273 = vcmask 408576
    %v275 = vsel %vm273, %v226, 0
    %vm277 = vcmask 1040384
    %v279 = vsel %vm277, %v265, 0
    %v282 = vsel %vm277, %v266, 0
    %284 = vmatprep.subr.bf16.mxu0 %v260
    %285 = vmatpush1.bf16.msra.mxu0 %v259
    %286 = vmatprep.subr.bf16.mxu0 %v262
    %287 = vmatpush1.bf16.msra.mxu0 %v261
    %288 = vmatprep.subr.bf16.mxu0 %v264
    %289 = vmatpush1.bf16.msra.mxu0 %v263
    %290 = vmatprep.subr.bf16.mxu0 %v282
    %291 = vmatpush1.bf16.msra.mxu0 %v279
    %292 = vmatprep.subr.bf16.mxu0 0
    %293 = vmatpush1.bf16.msra.mxu0 0
    %294 = vmatprep.subr.bf16.mxu0 0
    %295 = vmatpush1.bf16.msra.mxu0 0
    %296 = vmatprep.subr.bf16.mxu0 0
    %297 = vmatpush1.bf16.msra.mxu0 0
    %298 = vmatprep.subr.bf16.mxu0 0
    %299 = vmatpush1.bf16.msra.mxu0 0
    %300 = vmatprep.subr.bf16.mxu0 0
    %301 = vmatpush1.bf16.msra.mxu0 0
    %302 = vmatprep.subr.bf16.mxu0 0
    %303 = vmatpush1.bf16.msra.mxu0 0
    %304 = vmatprep.subr.bf16.mxu0 0
    %305 = vmatpush1.bf16.msra.mxu0 0
    %306 = vmatprep.subr.bf16.mxu0 0
    %307 = vmatpush1.bf16.msra.mxu0 0
    %308 = vmatprep.subr.bf16.mxu0 0
    %309 = vmatpush1.bf16.msra.mxu0 0
    %310 = vmatprep.subr.bf16.mxu0 0
    %311 = vmatpush1.bf16.msra.mxu0 0
    %312 = vmatprep.subr.bf16.mxu0 0
    %313 = vmatpush1.bf16.msra.mxu0 0
    %314 = vmatprep.subr.bf16.mxu0 0
    %315 = vmatpush1.bf16.msra.mxu0 0
    %316 = vmatprep.mubr.bf16.mxu0 0
    %317 = vmatmul.mubr.bf16.gmra.mrb[0].mxu0 %v275
    %v318 = vpop.f32.mrb[0].mxu0
    %v319 = vadd.f32 %v231, %v318
    %v320 = vpop.f32.mrb[0].mxu0
    %v321 = vadd.f32 %v235, %v320
    %v322 = vpop.f32.mrb[0].mxu0
    %v323 = vadd.f32 %v231, %v322
    %v324 = vpop.f32.mrb[0].mxu0
    %v325 = vadd.f32 %v235, %v324
    %326 = vdwg.mxu0
    %v343 = vunpack.c.l.b16 %v51
    %v344 = vunpack.c.l.b16 %v52
    %v345 = vunpack.c.l.b16 %v53
    %v346 = vunpack.c.l.b16 %v54
    %v347 = vunpack.c.l.b16 %v55
    %v348 = vunpack.c.l.b16 %v56
    %v349 = vunpack.c.l.b16 %v57
    %v350 = vunpack.c.l.b16 %v58
    %v351 = vunpack.c.l.b16 %v59
    %v352 = vunpack.c.l.b16 %v60
    %v353 = vunpack.c.l.b16 %v61
    %v354 = vunpack.c.l.b16 %v62
    %v355 = vunpack.c.l.b16 %v63
    %v356 = vunpack.c.l.b16 %v64
    %v357 = vunpack.c.l.b16 %v65
    %v358 = vunpack.c.l.b16 %v66
    %v359 = vpack.c.b16 %v344, %v343
    %v360 = vpack.c.b16 %v346, %v345
    %v361 = vpack.c.b16 %v348, %v347
    %v362 = vpack.c.b16 %v350, %v349
    %v363 = vpack.c.b16 %v352, %v351
    %v364 = vpack.c.b16 %v354, %v353
    %v365 = vpack.c.b16 %v356, %v355
    %v366 = vpack.c.b16 %v358, %v357
    %375 = vmatprep.subr.bf16.mxu0 0
    %376 = vmatpush1.bf16.msra.mxu0 %v359
    %377 = vmatprep.subr.bf16.mxu0 0
    %378 = vmatpush1.bf16.msra.mxu0 %v360
    %379 = vmatprep.subr.bf16.mxu0 0
    %380 = vmatpush1.bf16.msra.mxu0 %v361
    %381 = vmatprep.subr.bf16.mxu0 0
    %382 = vmatpush1.bf16.msra.mxu0 %v362
    %383 = vmatprep.subr.bf16.mxu0 0
    %384 = vmatpush1.bf16.msra.mxu0 %v363
    %385 = vmatprep.subr.bf16.mxu0 0
    %386 = vmatpush1.bf16.msra.mxu0 %v364
    %387 = vmatprep.subr.bf16.mxu0 0
    %388 = vmatpush1.bf16.msra.mxu0 %v365
    %389 = vmatprep.subr.bf16.mxu0 0
    %390 = vmatpush1.bf16.msra.mxu0 %v366
    %391 = vmatprep.subr.bf16.mxu0 0
    %392 = vmatpush1.bf16.msra.mxu0 0
    %393 = vmatprep.subr.bf16.mxu0 0
    %394 = vmatpush1.bf16.msra.mxu0 0
    %395 = vmatprep.subr.bf16.mxu0 0
    %396 = vmatpush1.bf16.msra.mxu0 0
    %397 = vmatprep.subr.bf16.mxu0 0
    %398 = vmatpush1.bf16.msra.mxu0 0
    %399 = vmatprep.subr.bf16.mxu0 0
    %400 = vmatpush1.bf16.msra.mxu0 0
    %401 = vmatprep.subr.bf16.mxu0 0
    %402 = vmatpush1.bf16.msra.mxu0 0
    %403 = vmatprep.subr.bf16.mxu0 0
    %404 = vmatpush1.bf16.msra.mxu0 0
    %405 = vmatprep.subr.bf16.mxu0 0
    %406 = vmatpush1.bf16.msra.mxu0 0
    %407 = vmatprep.mubr.bf16.mxu0 0
    %408 = vmatmul.mubr.bf16.gmra.mrb[0].mxu0 0
    %v409 = vpop.f32.mrb[0].mxu0
    %v410 = vadd.f32 0.0, %v409
    %v411 = vpop.f32.mrb[0].mxu0
    %v412 = vpop.f32.mrb[0].mxu0
    %v413 = vpop.f32.mrb[0].mxu0
    %414 = vdwg.mxu0
    %v415 = vadd.f32 %v319, %v410
    %v416 = vtanh.pop %v415
    %v433 = vunpack.c.l.b16 %v68
    %v434 = vunpack.c.l.b16 %v69
    %v435 = vunpack.c.l.b16 %v70
    %v436 = vunpack.c.l.b16 %v71
    %v437 = vunpack.c.l.b16 %v72
    %v438 = vunpack.c.l.b16 %v73
    %v439 = vunpack.c.l.b16 %v74
    %v440 = vunpack.c.l.b16 %v75
    %v441 = vunpack.c.l.b16 %v76
    %v442 = vunpack.c.l.b16 %v77
    %v443 = vunpack.c.l.b16 %v78
    %v444 = vunpack.c.l.b16 %v79
    %v445 = vunpack.c.l.b16 %v80
    %v446 = vunpack.c.l.b16 %v81
    %v447 = vunpack.c.l.b16 %v82
    %v448 = vunpack.c.l.b16 %v83
    %v449 = vpack.c.b16 %v434, %v433
    %v450 = vpack.c.b16 %v436, %v435
    %v451 = vpack.c.b16 %v438, %v437
    %v452 = vpack.c.b16 %v440, %v439
    %v453 = vpack.c.b16 %v442, %v441
    %v454 = vpack.c.b16 %v444, %v443
    %v455 = vpack.c.b16 %v446, %v445
    %v456 = vpack.c.b16 %v448, %v447
    %465 = vmatprep.subr.bf16.mxu0 0
    %466 = vmatpush1.bf16.msra.mxu0 %v449
    %467 = vmatprep.subr.bf16.mxu0 0
    %468 = vmatpush1.bf16.msra.mxu0 %v450
    %469 = vmatprep.subr.bf16.mxu0 0
    %470 = vmatpush1.bf16.msra.mxu0 %v451
    %471 = vmatprep.subr.bf16.mxu0 0
    %472 = vmatpush1.bf16.msra.mxu0 %v452
    %473 = vmatprep.subr.bf16.mxu0 0
    %474 = vmatpush1.bf16.msra.mxu0 %v453
    %475 = vmatprep.subr.bf16.mxu0 0
    %476 = vmatpush1.bf16.msra.mxu0 %v454
    %477 = vmatprep.subr.bf16.mxu0 0
    %478 = vmatpush1.bf16.msra.mxu0 %v455
    %479 = vmatprep.subr.bf16.mxu0 0
    %480 = vmatpush1.bf16.msra.mxu0 %v456
    %481 = vmatprep.subr.bf16.mxu0 0
    %482 = vmatpush1.bf16.msra.mxu0 0
    %483 = vmatprep.subr.bf16.mxu0 0
    %484 = vmatpush1.bf16.msra.mxu0 0
    %485 = vmatprep.subr.bf16.mxu0 0
    %486 = vmatpush1.bf16.msra.mxu0 0
    %487 = vmatprep.subr.bf16.mxu0 0
    %488 = vmatpush1.bf16.msra.mxu0 0
    %489 = vmatprep.subr.bf16.mxu0 0
    %490 = vmatpush1.bf16.msra.mxu0 0
    %491 = vmatprep.subr.bf16.mxu0 0
    %492 = vmatpush1.bf16.msra.mxu0 0
    %493 = vmatprep.subr.bf16.mxu0 0
    %494 = vmatpush1.bf16.msra.mxu0 0
    %495 = vmatprep.subr.bf16.mxu0 0
    %496 = vmatpush1.bf16.msra.mxu0 0
    %497 = vmatprep.mubr.bf16.mxu0 0
    %498 = vmatmul.mubr.bf16.gmra.mrb[0].mxu0 0
    %v499 = vpop.f32.mrb[0].mxu0
    %v500 = vadd.f32 0.0, %v499
    %v501 = vpop.f32.mrb[0].mxu0
    %v502 = vpop.f32.mrb[0].mxu0
    %v503 = vpop.f32.mrb[0].mxu0
    %504 = vdwg.mxu0
    %v505 = vadd.f32 %v325, %v500
    %v506 = vtanh.pop %v505
    %v507 = vpack.c.bf16 %v416, %v416
    %508 = vmatprep.subr.bf16.mxu0 0
    %509 = vmatpush1.bf16.msra.mxu0 %v359
    %510 = vmatprep.subr.bf16.mxu0 0
    %511 = vmatpush1.bf16.msra.mxu0 %v360
    %512 = vmatprep.subr.bf16.mxu0 0
    %513 = vmatpush1.bf16.msra.mxu0 %v361
    %514 = vmatprep.subr.bf16.mxu0 0
    %515 = vmatpush1.bf16.msra.mxu0 %v362
    %516 = vmatprep.subr.bf16.mxu0 0
    %517 = vmatpush1.bf16.msra.mxu0 %v363
    %518 = vmatprep.subr.bf16.mxu0 0
    %519 = vmatpush1.bf16.msra.mxu0 %v364
    %520 = vmatprep.subr.bf16.mxu0 0
    %521 = vmatpush1.bf16.msra.mxu0 %v365
    %522 = vmatprep.subr.bf16.mxu0 0
    %523 = vmatpush1.bf16.msra.mxu0 %v366
    %524 = vmatprep.subr.bf16.mxu0 0
    %525 = vmatpush1.bf16.msra.mxu0 0
    %526 = vmatprep.subr.bf16.mxu0 0
    %527 = vmatpush1.bf16.msra.mxu0 0
    %528 = vmatprep.subr.bf16.mxu0 0
    %529 = vmatpush1.bf16.msra.mxu0 0
    %530 = vmatprep.subr.bf16.mxu0 0
    %531 = vmatpush1.bf16.msra.mxu0 0
    %532 = vmatprep.subr.bf16.mxu0 0
    %533 = vmatpush1.bf16.msra.mxu0 0
    %534 = vmatprep.subr.bf16.mxu0 0
    %535 = vmatpush1.bf16.msra.mxu0 0
    %536 = vmatprep.subr.bf16.mxu0 0
    %537 = vmatpush1.bf16.msra.mxu0 0
    %538 = vmatprep.subr.bf16.mxu0 0
    %539 = vmatpush1.bf16.msra.mxu0 0
    %540 = vmatprep.mubr.bf16.mxu0 0
    %541 = vmatmul.mubr.bf16.gmra.mrb[0].mxu0 %v507
    %v542 = vpop.f32.mrb[0].mxu0
    %v543 = vadd.f32 0.0, %v542
    %v544 = vpop.f32.mrb[0].mxu0
    %v545 = vpop.f32.mrb[0].mxu0
    %v546 = vpop.f32.mrb[0].mxu0
    %547 = vdwg.mxu0
    %v548 = vadd.f32 %v323, %v543
    %v549 = vtanh.pop %v548
    %v550 = vpack.c.bf16 %v506, %v506
    %551 = vmatprep.subr.bf16.mxu0 0
    %552 = vmatpush1.bf16.msra.mxu0 %v449
    %553 = vmatprep.subr.bf16.mxu0 0
    %554 = vmatpush1.bf16.msra.mxu0 %v450
    %555 = vmatprep.subr.bf16.mxu0 0
    %556 = vmatpush1.bf16.msra.mxu0 %v451
    %557 = vmatprep.subr.bf16.mxu0 0
    %558 = vmatpush1.bf16.msra.mxu0 %v452
    %559 = vmatprep.subr.bf16.mxu0 0
    %560 = vmatpush1.bf16.msra.mxu0 %v453
    %561 = vmatprep.subr.bf16.mxu0 0
    %562 = vmatpush1.bf16.msra.mxu0 %v454
    %563 = vmatprep.subr.bf16.mxu0 0
    %564 = vmatpush1.bf16.msra.mxu0 %v455
    %565 = vmatprep.subr.bf16.mxu0 0
    %566 = vmatpush1.bf16.msra.mxu0 %v456
    %567 = vmatprep.subr.bf16.mxu0 0
    %568 = vmatpush1.bf16.msra.mxu0 0
    %569 = vmatprep.subr.bf16.mxu0 0
    %570 = vmatpush1.bf16.msra.mxu0 0
    %571 = vmatprep.subr.bf16.mxu0 0
    %572 = vmatpush1.bf16.msra.mxu0 0
    %573 = vmatprep.subr.bf16.mxu0 0
    %574 = vmatpush1.bf16.msra.mxu0 0
    %575 = vmatprep.subr.bf16.mxu0 0
    %576 = vmatpush1.bf16.msra.mxu0 0
    %577 = vmatprep.subr.bf16.mxu0 0
    %578 = vmatpush1.bf16.msra.mxu0 0
    %579 = vmatprep.subr.bf16.mxu0 0
    %580 = vmatpush1.bf16.msra.mxu0 0
    %581 = vmatprep.subr.bf16.mxu0 0
    %582 = vmatpush1.bf16.msra.mxu0 0
    %583 = vmatprep.mubr.bf16.mxu0 0
    %584 = vmatmul.mubr.bf16.gmra.mrb[0].mxu0 %v550
    %v585 = vpop.f32.mrb[0].mxu0
    %v586 = vadd.f32 0.0, %v585
    %v587 = vpop.f32.mrb[0].mxu0
    %v588 = vpop.f32.mrb[0].mxu0
    %v589 = vpop.f32.mrb[0].mxu0
    %590 = vdwg.mxu0
    %v591 = vadd.f32 %v321, %v586
    %v592 = vtanh.pop %v591
    %v593 = vpack.c.bf16 %v549, %v416
    %v594 = vpack.c.bf16 %v506, %v592
    %v596 = vlaneseq
    %v597 = vshrl.u32 %v596, 7
    %v598 = vsub.s32 0, %v597
    %v599 = vrot.slane %v158, %v598
    %v600 = vlaneseq
    %v601 = vshrl.u32 %v600, 7
    %v602 = vsub.s32 1, %v601
    %v603 = vrot.slane %v158, %v602
    %v638 = vunpack.c.l.b16 %v125
    %v639 = vunpack.c.h.b16 %v125
    %v640 = vunpack.c.l.b16 %v126
    %v641 = vunpack.c.h.b16 %v126
    %v642 = vunpack.c.l.b16 %v127
    %v643 = vunpack.c.h.b16 %v127
    %v644 = vunpack.c.l.b16 %v128
    %v645 = vunpack.c.h.b16 %v128
    %v646 = vunpack.c.l.b16 %v129
    %v647 = vunpack.c.h.b16 %v129
    %v648 = vunpack.c.l.b16 %v130
    %v649 = vunpack.c.h.b16 %v130
    %v650 = vunpack.c.l.b16 %v131
    %v651 = vunpack.c.h.b16 %v131
    %v652 = vunpack.c.l.b16 %v132
    %v653 = vunpack.c.h.b16 %v132
    %v654 = vunpack.c.l.b16 %v133
    %v655 = vunpack.c.h.b16 %v133
    %v656 = vunpack.c.l.b16 %v134
    %v657 = vunpack.c.h.b16 %v134
    %v658 = vunpack.c.l.b16 %v135
    %v659 = vunpack.c.h.b16 %v135
    %v660 = vunpack.c.l.b16 %v136
    %v661 = vunpack.c.h.b16 %v136
    %v662 = vunpack.c.l.b16 %v137
    %v663 = vunpack.c.h.b16 %v137
    %v664 = vunpack.c.l.b16 %v138
    %v665 = vunpack.c.h.b16 %v138
    %v666 = vunpack.c.l.b16 %v139
    %v667 = vunpack.c.h.b16 %v139
    %v668 = vunpack.c.l.b16 %v140
    %v669 = vunpack.c.h.b16 %v140
    %v670 = vunpack.c.l.b16 %v141
    %v671 = vunpack.c.h.b16 %v141
    %v672 = vunpack.c.l.b16 %v142
    %v673 = vunpack.c.h.b16 %v142
    %v674 = vunpack.c.l.b16 %v143
    %v675 = vunpack.c.h.b16 %v143
    %v676 = vunpack.c.l.b16 %v144
    %v677 = vunpack.c.h.b16 %v144
    %v678 = vunpack.c.l.b16 %v145
    %v679 = vunpack.c.h.b16 %v145
    %v680 = vunpack.c.l.b16 %v146
    %v681 = vunpack.c.h.b16 %v146
    %v682 = vunpack.c.l.b16 %v147
    %v683 = vunpack.c.h.b16 %v147
    %v684 = vunpack.c.l.b16 %v148
    %v685 = vunpack.c.h.b16 %v148
    %v686 = vunpack.c.l.b16 %v149
    %v687 = vunpack.c.h.b16 %v149
    %v688 = vunpack.c.l.b16 %v150
    %v689 = vunpack.c.h.b16 %v150
    %v690 = vunpack.c.l.b16 %v151
    %v691 = vunpack.c.h.b16 %v151
    %v692 = vunpack.c.l.b16 %v152
    %v693 = vunpack.c.h.b16 %v152
    %v694 = vunpack.c.l.b16 %v153
    %v695 = vunpack.c.h.b16 %v153
    %v696 = vunpack.c.l.b16 %v154
    %v697 = vunpack.c.h.b16 %v154
    %v698 = vunpack.c.l.b16 %v155
    %v699 = vunpack.c.h.b16 %v155
    %v700 = vunpack.c.l.b16 %v156
    %v701 = vunpack.c.h.b16 %v156
    %v702 = vpack.c.b16 %v640, %v638
    %v703 = vpack.c.b16 %v641, %v639
    %v704 = vpack.c.b16 %v644, %v642
    %v705 = vpack.c.b16 %v645, %v643
    %v706 = vpack.c.b16 %v648, %v646
    %v707 = vpack.c.b16 %v649, %v647
    %v708 = vpack.c.b16 %v652, %v650
    %v709 = vpack.c.b16 %v653, %v651
    %v710 = vpack.c.b16 %v656, %v654
    %v711 = vpack.c.b16 %v657, %v655
    %v712 = vpack.c.b16 %v660, %v658
    %v713 = vpack.c.b16 %v661, %v659
    %v714 = vpack.c.b16 %v664, %v662
    %v715 = vpack.c.b16 %v665, %v663
    %v716 = vpack.c.b16 %v668, %v666
    %v717 = vpack.c.b16 %v669, %v667
    %v718 = vpack.c.b16 %v672, %v670
    %v719 = vpack.c.b16 %v673, %v671
    %v720 = vpack.c.b16 %v676, %v674
    %v721 = vpack.c.b16 %v677, %v675
    %v722 = vpack.c.b16 %v680, %v678
    %v723 = vpack.c.b16 %v681, %v679
    %v724 = vpack.c.b16 %v684, %v682
    %v725 = vpack.c.b16 %v685, %v683
    %v726 = vpack.c.b16 %v688, %v686
    %v727 = vpack.c.b16 %v689, %v687
    %v728 = vpack.c.b16 %v692, %v690
    %v729 = vpack.c.b16 %v693, %v691
    %v730 = vpack.c.b16 %v696, %v694
    %v731 = vpack.c.b16 %v697, %v695
    %v732 = vpack.c.b16 %v700, %v698
    %v733 = vpack.c.b16 %v701, %v699
    %766 = vmatprep.subr.bf16.mxu0 %v703
    %767 = vmatpush1.bf16.msra.mxu0 %v702
    %768 = vmatprep.subr.bf16.mxu0 %v705
    %769 = vmatpush1.bf16.msra.mxu0 %v704
    %770 = vmatprep.subr.bf16.mxu0 %v707
    %771 = vmatpush1.bf16.msra.mxu0 %v706
    %772 = vmatprep.subr.bf16.mxu0 %v709
    %773 = vmatpush1.bf16.msra.mxu0 %v708
    %774 = vmatprep.subr.bf16.mxu0 %v711
    %775 = vmatpush1.bf16.msra.mxu0 %v710
    %776 = vmatprep.subr.bf16.mxu0 %v713
    %777 = vmatpush1.bf16.msra.mxu0 %v712
    %778 = vmatprep.subr.bf16.mxu0 %v715
    %779 = vmatpush1.bf16.msra.mxu0 %v714
    %780 = vmatprep.subr.bf16.mxu0 %v717
    %781 = vmatpush1.bf16.msra.mxu0 %v716
    %782 = vmatprep.subr.bf16.mxu0 %v719
    %783 = vmatpush1.bf16.msra.mxu0 %v718
    %784 = vmatprep.subr.bf16.mxu0 %v721
    %785 = vmatpush1.bf16.msra.mxu0 %v720
    %786 = vmatprep.subr.bf16.mxu0 %v723
    %787 = vmatpush1.bf16.msra.mxu0 %v722
    %788 = vmatprep.subr.bf16.mxu0 %v725
    %789 = vmatpush1.bf16.msra.mxu0 %v724
    %790 = vmatprep.subr.bf16.mxu0 %v727
    %791 = vmatpush1.bf16.msra.mxu0 %v726
    %792 = vmatprep.subr.bf16.mxu0 %v729
    %793 = vmatpush1.bf16.msra.mxu0 %v728
    %794 = vmatprep.subr.bf16.mxu0 %v731
    %795 = vmatpush1.bf16.msra.mxu0 %v730
    %796 = vmatprep.subr.bf16.mxu0 %v733
    %797 = vmatpush1.bf16.msra.mxu0 %v732
    %798 = vmatprep.mubr.bf16.mxu0 %v594
    %799 = vmatmul.mubr.bf16.gmra.mrb[0].mxu0 %v593
    %v800 = vpop.f32.mrb[0].mxu0
    %v801 = vadd.f32 %v599, %v800
    %v802 = vpop.f32.mrb[0].mxu0
    %v803 = vadd.f32 %v603, %v802
    %v804 = vpop.f32.mrb[0].mxu0
    %v805 = vadd.f32 %v599, %v804
    %v806 = vpop.f32.mrb[0].mxu0
    %v807 = vadd.f32 %v603, %v806
    %808 = vdwg.mxu0
    %v825 = vunpack.c.l.b16 %v85
    %v826 = vunpack.c.l.b16 %v86
    %v827 = vunpack.c.l.b16 %v87
    %v828 = vunpack.c.l.b16 %v88
    %v829 = vunpack.c.l.b16 %v89
    %v830 = vunpack.c.l.b16 %v90
    %v831 = vunpack.c.l.b16 %v91
    %v832 = vunpack.c.l.b16 %v92
    %v833 = vunpack.c.l.b16 %v93
    %v834 = vunpack.c.l.b16 %v94
    %v835 = vunpack.c.l.b16 %v95
    %v836 = vunpack.c.l.b16 %v96
    %v837 = vunpack.c.l.b16 %v97
    %v838 = vunpack.c.l.b16 %v98
    %v839 = vunpack.c.l.b16 %v99
    %v840 = vunpack.c.l.b16 %v100
    %v841 = vpack.c.b16 %v826, %v825
    %v842 = vpack.c.b16 %v828, %v827
    %v843 = vpack.c.b16 %v830, %v829
    %v844 = vpack.c.b16 %v832, %v831
    %v845 = vpack.c.b16 %v834, %v833
    %v846 = vpack.c.b16 %v836, %v835
    %v847 = vpack.c.b16 %v838, %v837
    %v848 = vpack.c.b16 %v840, %v839
    %857 = vmatprep.subr.bf16.mxu0 0
    %858 = vmatpush1.bf16.msra.mxu0 %v841
    %859 = vmatprep.subr.bf16.mxu0 0
    %860 = vmatpush1.bf16.msra.mxu0 %v842
    %861 = vmatprep.subr.bf16.mxu0 0
    %862 = vmatpush1.bf16.msra.mxu0 %v843
    %863 = vmatprep.subr.bf16.mxu0 0
    %864 = vmatpush1.bf16.msra.mxu0 %v844
    %865 = vmatprep.subr.bf16.mxu0 0
    %866 = vmatpush1.bf16.msra.mxu0 %v845
    %867 = vmatprep.subr.bf16.mxu0 0
    %868 = vmatpush1.bf16.msra.mxu0 %v846
    %869 = vmatprep.subr.bf16.mxu0 0
    %870 = vmatpush1.bf16.msra.mxu0 %v847
    %871 = vmatprep.subr.bf16.mxu0 0
    %872 = vmatpush1.bf16.msra.mxu0 %v848
    %873 = vmatprep.subr.bf16.mxu0 0
    %874 = vmatpush1.bf16.msra.mxu0 0
    %875 = vmatprep.subr.bf16.mxu0 0
    %876 = vmatpush1.bf16.msra.mxu0 0
    %877 = vmatprep.subr.bf16.mxu0 0
    %878 = vmatpush1.bf16.msra.mxu0 0
    %879 = vmatprep.subr.bf16.mxu0 0
    %880 = vmatpush1.bf16.msra.mxu0 0
    %881 = vmatprep.subr.bf16.mxu0 0
    %882 = vmatpush1.bf16.msra.mxu0 0
    %883 = vmatprep.subr.bf16.mxu0 0
    %884 = vmatpush1.bf16.msra.mxu0 0
    %885 = vmatprep.subr.bf16.mxu0 0
    %886 = vmatpush1.bf16.msra.mxu0 0
    %887 = vmatprep.subr.bf16.mxu0 0
    %888 = vmatpush1.bf16.msra.mxu0 0
    %889 = vmatprep.mubr.bf16.mxu0 0
    %890 = vmatmul.mubr.bf16.gmra.mrb[0].mxu0 0
    %v891 = vpop.f32.mrb[0].mxu0
    %v892 = vadd.f32 0.0, %v891
    %v893 = vpop.f32.mrb[0].mxu0
    %v894 = vpop.f32.mrb[0].mxu0
    %v895 = vpop.f32.mrb[0].mxu0
    %896 = vdwg.mxu0
    %v897 = vadd.f32 %v801, %v892
    %v898 = vtanh.pop %v897
    %v915 = vunpack.c.l.b16 %v102
    %v916 = vunpack.c.l.b16 %v103
    %v917 = vunpack.c.l.b16 %v104
    %v918 = vunpack.c.l.b16 %v105
    %v919 = vunpack.c.l.b16 %v106
    %v920 = vunpack.c.l.b16 %v107
    %v921 = vunpack.c.l.b16 %v108
    %v922 = vunpack.c.l.b16 %v109
    %v923 = vunpack.c.l.b16 %v110
    %v924 = vunpack.c.l.b16 %v111
    %v925 = vunpack.c.l.b16 %v112
    %v926 = vunpack.c.l.b16 %v113
    %v927 = vunpack.c.l.b16 %v114
    %v928 = vunpack.c.l.b16 %v115
    %v929 = vunpack.c.l.b16 %v116
    %v930 = vunpack.c.l.b16 %v117
    %v931 = vpack.c.b16 %v916, %v915
    %v932 = vpack.c.b16 %v918, %v917
    %v933 = vpack.c.b16 %v920, %v919
    %v934 = vpack.c.b16 %v922, %v921
    %v935 = vpack.c.b16 %v924, %v923
    %v936 = vpack.c.b16 %v926, %v925
    %v937 = vpack.c.b16 %v928, %v927
    %v938 = vpack.c.b16 %v930, %v929
    %947 = vmatprep.subr.bf16.mxu0 0
    %948 = vmatpush1.bf16.msra.mxu0 %v931
    %949 = vmatprep.subr.bf16.mxu0 0
    %950 = vmatpush1.bf16.msra.mxu0 %v932
    %951 = vmatprep.subr.bf16.mxu0 0
    %952 = vmatpush1.bf16.msra.mxu0 %v933
    %953 = vmatprep.subr.bf16.mxu0 0
    %954 = vmatpush1.bf16.msra.mxu0 %v934
    %955 = vmatprep.subr.bf16.mxu0 0
    %956 = vmatpush1.bf16.msra.mxu0 %v935
    %957 = vmatprep.subr.bf16.mxu0 0
    %958 = vmatpush1.bf16.msra.mxu0 %v936
    %959 = vmatprep.subr.bf16.mxu0 0
    %960 = vmatpush1.bf16.msra.mxu0 %v937
    %961 = vmatprep.subr.bf16.mxu0 0
    %962 = vmatpush1.bf16.msra.mxu0 %v938
    %963 = vmatprep.subr.bf16.mxu0 0
    %964 = vmatpush1.bf16.msra.mxu0 0
    %965 = vmatprep.subr.bf16.mxu0 0
    %966 = vmatpush1.bf16.msra.mxu0 0
    %967 = vmatprep.subr.bf16.mxu0 0
    %968 = vmatpush1.bf16.msra.mxu0 0
    %969 = vmatprep.subr.bf16.mxu0 0
    %970 = vmatpush1.bf16.msra.mxu0 0
    %971 = vmatprep.subr.bf16.mxu0 0
    %972 = vmatpush1.bf16.msra.mxu0 0
    %973 = vmatprep.subr.bf16.mxu0 0
    %974 = vmatpush1.bf16.msra.mxu0 0
    %975 = vmatprep.subr.bf16.mxu0 0
    %976 = vmatpush1.bf16.msra.mxu0 0
    %977 = vmatprep.subr.bf16.mxu0 0
    %978 = vmatpush1.bf16.msra.mxu0 0
    %979 = vmatprep.mubr.bf16.mxu0 0
    %980 = vmatmul.mubr.bf16.gmra.mrb[0].mxu0 0
    %v981 = vpop.f32.mrb[0].mxu0
    %v982 = vadd.f32 0.0, %v981
    %v983 = vpop.f32.mrb[0].mxu0
    %v984 = vpop.f32.mrb[0].mxu0
    %v985 = vpop.f32.mrb[0].mxu0
    %986 = vdwg.mxu0
    %v987 = vadd.f32 %v807, %v982
    %v988 = vtanh.pop %v987
    %v989 = vpack.c.bf16 %v898, %v898
    %990 = vmatprep.subr.bf16.mxu0 0
    %991 = vmatpush1.bf16.msra.mxu0 %v841
    %992 = vmatprep.subr.bf16.mxu0 0
    %993 = vmatpush1.bf16.msra.mxu0 %v842
    %994 = vmatprep.subr.bf16.mxu0 0
    %995 = vmatpush1.bf16.msra.mxu0 %v843
    %996 = vmatprep.subr.bf16.mxu0 0
    %997 = vmatpush1.bf16.msra.mxu0 %v844
    %998 = vmatprep.subr.bf16.mxu0 0
    %999 = vmatpush1.bf16.msra.mxu0 %v845
    %1000 = vmatprep.subr.bf16.mxu0 0
    %1001 = vmatpush1.bf16.msra.mxu0 %v846
    %1002 = vmatprep.subr.bf16.mxu0 0
    %1003 = vmatpush1.bf16.msra.mxu0 %v847
    %1004 = vmatprep.subr.bf16.mxu0 0
    %1005 = vmatpush1.bf16.msra.mxu0 %v848
    %1006 = vmatprep.subr.bf16.mxu0 0
    %1007 = vmatpush1.bf16.msra.mxu0 0
    %1008 = vmatprep.subr.bf16.mxu0 0
    %1009 = vmatpush1.bf16.msra.mxu0 0
    %1010 = vmatprep.subr.bf16.mxu0 0
    %1011 = vmatpush1.bf16.msra.mxu0 0
    %1012 = vmatprep.subr.bf16.mxu0 0
    %1013 = vmatpush1.bf16.msra.mxu0 0
    %1014 = vmatprep.subr.bf16.mxu0 0
    %1015 = vmatpush1.bf16.msra.mxu0 0
    %1016 = vmatprep.subr.bf16.mxu0 0
    %1017 = vmatpush1.bf16.msra.mxu0 0
    %1018 = vmatprep.subr.bf16.mxu0 0
    %1019 = vmatpush1.bf16.msra.mxu0 0
    %1020 = vmatprep.subr.bf16.mxu0 0
    %1021 = vmatpush1.bf16.msra.mxu0 0
    %1022 = vmatprep.mubr.bf16.mxu0 0
    %1023 = vmatmul.mubr.bf16.gmra.mrb[0].mxu0 %v989
    %v1024 = vpop.f32.mrb[0].mxu0
    %v1025 = vadd.f32 0.0, %v1024
    %v1026 = vpop.f32.mrb[0].mxu0
    %v1027 = vpop.f32.mrb[0].mxu0
    %v1028 = vpop.f32.mrb[0].mxu0
    %1029 = vdwg.mxu0
    %v1030 = vadd.f32 %v805, %v1025
    %v1031 = vtanh.pop %v1030
    %v1032 = vpack.c.bf16 %v988, %v988
    %1033 = vmatprep.subr.bf16.mxu0 0
    %1034 = vmatpush1.bf16.msra.mxu0 %v931
    %1035 = vmatprep.subr.bf16.mxu0 0
    %1036 = vmatpush1.bf16.msra.mxu0 %v932
    %1037 = vmatprep.subr.bf16.mxu0 0
    %1038 = vmatpush1.bf16.msra.mxu0 %v933
    %1039 = vmatprep.subr.bf16.mxu0 0
    %1040 = vmatpush1.bf16.msra.mxu0 %v934
    %1041 = vmatprep.subr.bf16.mxu0 0
    %1042 = vmatpush1.bf16.msra.mxu0 %v935
    %1043 = vmatprep.subr.bf16.mxu0 0
    %1044 = vmatpush1.bf16.msra.mxu0 %v936
    %1045 = vmatprep.subr.bf16.mxu0 0
    %1046 = vmatpush1.bf16.msra.mxu0 %v937
    %1047 = vmatprep.subr.bf16.mxu0 0
    %1048 = vmatpush1.bf16.msra.mxu0 %v938
    %1049 = vmatprep.subr.bf16.mxu0 0
    %1050 = vmatpush1.bf16.msra.mxu0 0
    %1051 = vmatprep.subr.bf16.mxu0 0
    %1052 = vmatpush1.bf16.msra.mxu0 0
    %1053 = vmatprep.subr.bf16.mxu0 0
    %1054 = vmatpush1.bf16.msra.mxu0 0
    %1055 = vmatprep.subr.bf16.mxu0 0
    %1056 = vmatpush1.bf16.msra.mxu0 0
    %1057 = vmatprep.subr.bf16.mxu0 0
    %1058 = vmatpush1.bf16.msra.mxu0 0
    %1059 = vmatprep.subr.bf16.mxu0 0
    %1060 = vmatpush1.bf16.msra.mxu0 0
    %1061 = vmatprep.subr.bf16.mxu0 0
    %1062 = vmatpush1.bf16.msra.mxu0 0
    %1063 = vmatprep.subr.bf16.mxu0 0
    %1064 = vmatpush1.bf16.msra.mxu0 0
    %1065 = vmatprep.mubr.bf16.mxu0 0
    %1066 = vmatmul.mubr.bf16.gmra.mrb[0].mxu0 %v1032
    %v1067 = vpop.f32.mrb[0].mxu0
    %v1068 = vadd.f32 0.0, %v1067
    %v1069 = vpop.f32.mrb[0].mxu0
    %v1070 = vpop.f32.mrb[0].mxu0
    %v1071 = vpop.f32.mrb[0].mxu0
    %1072 = vdwg.mxu0
    %v1073 = vadd.f32 %v803, %v1068
    %v1074 = vtanh.pop %v1073
    %1076 = vrot.lane.b32.xlu0 %v1074, 100
    %v1077 = vpop.permute.xlu0 %1076
    %1080 = vrot.lane.b32.xlu0 %v988, 100
    %v1081 = vpop.permute.xlu0 %1080
    %vm1083 = vcmask 818176
    %v1084 = vsel %vm1083, %v898, %v1077
    %vm1085 = vcmask 588800
    %v1086 = vsel %vm1085, %v1077, 0.0
    %v1087 = vsel %vm1083, %v1031, %v1081
    %v1088 = vsel %vm1085, %v1081, 0.0
    %1090 = vrot.lane.b32.xlu0 %v1088, 3
    %v1091 = vpop.permute.xlu0 %1090
    %1096 = vrot.lane.b32.xlu0 %v1084, 3
    %v1097 = vpop.permute.xlu0 %1096
    %1098 = vrot.lane.b32.xlu0 %v1086, 3
    %v1099 = vpop.permute.xlu0 %1098
    %1100 = vrot.lane.b32.xlu0 %v1087, 3
    %v1101 = vpop.permute.xlu0 %1100
    %vm1102 = vcmask 23552
    %v1103 = vsel %vm1102, %v1097, %v1099
    %v1104 = vsel %vm1102, %v1099, %v1101
    %v1105 = vsel %vm1102, %v1101, %v1091
    %v1110 = vsel %vm1102, %v1091, %v1097
    %1111 = vrot.lane.b32.xlu0 %v1088, 2
    %v1112 = vpop.permute.xlu0 %1111
    %1114 = vrot.lane.b32.xlu0 %v1084, 2
    %v1115 = vpop.permute.xlu0 %1114
    %1116 = vrot.lane.b32.xlu0 %v1086, 2
    %v1117 = vpop.permute.xlu0 %1116
    %1118 = vrot.lane.b32.xlu0 %v1087, 2
    %v1119 = vpop.permute.xlu0 %1118
    %vm1120 = vcmask 15360
    %v1121 = vsel %vm1120, %v1115, %v1117
    %v1122 = vsel %vm1120, %v1117, %v1119
    %v1123 = vsel %vm1120, %v1119, %v1112
    %v1128 = vsel %vm1120, %v1112, %v1115
    %1129 = vrot.lane.b32.xlu0 %v1088, 1
    %v1130 = vpop.permute.xlu0 %1129
    %1132 = vrot.lane.b32.xlu0 %v1084, 1
    %v1133 = vpop.permute.xlu0 %1132
    %1134 = vrot.lane.b32.xlu0 %v1086, 1
    %v1135 = vpop.permute.xlu0 %1134
    %1136 = vrot.lane.b32.xlu0 %v1087, 1
    %v1137 = vpop.permute.xlu0 %1136
    %vm1138 = vcmask 7168
    %v1139 = vsel %vm1138, %v1133, %v1135
    %v1140 = vsel %vm1138, %v1135, %v1137
    %v1141 = vsel %vm1138, %v1137, %v1130
    %v1146 = vsel %vm1138, %v1130, %v1133
    %1147 = vrot.lane.b32.xlu0 %v1084, 127
    %v1148 = vpop.permute.xlu0 %1147
    %1149 = vrot.lane.b32.xlu0 %v1086, 127
    %v1150 = vpop.permute.xlu0 %1149
    %1151 = vrot.lane.b32.xlu0 %v1087, 127
    %v1152 = vpop.permute.xlu0 %1151
    %1153 = vrot.lane.b32.xlu0 %v1088, 127
    %v1154 = vpop.permute.xlu0 %1153
    %vm1155 = vcmask 1039360
    %v1156 = vsel %vm1155, %v1148, %v1150
    %v1157 = vsel %vm1155, %v1150, %v1152
    %v1158 = vsel %vm1155, %v1152, %v1154
    %v1164 = vsel %vm1155, %v1154, %v1148
    %1165 = vrot.lane.b32.xlu0 %v1084, 126
    %v1166 = vpop.permute.xlu0 %1165
    %1167 = vrot.lane.b32.xlu0 %v1086, 126
    %v1168 = vpop.permute.xlu0 %1167
    %1169 = vrot.lane.b32.xlu0 %v1087, 126
    %v1170 = vpop.permute.xlu0 %1169
    %1171 = vrot.lane.b32.xlu0 %v1088, 126
    %v1172 = vpop.permute.xlu0 %1171
    %vm1173 = vcmask 1031168
    %v1174 = vsel %vm1173, %v1166, %v1168
    %v1175 = vsel %vm1173, %v1168, %v1170
    %v1176 = vsel %vm1173, %v1170, %v1172
    %v1182 = vsel %vm1173, %v1172, %v1166
    %1183 = vrot.lane.b32.xlu0 %v1084, 125
    %v1184 = vpop.permute.xlu0 %1183
    %1185 = vrot.lane.b32.xlu0 %v1086, 125
    %v1186 = vpop.permute.xlu0 %1185
    %1187 = vrot.lane.b32.xlu0 %v1087, 125
    %v1188 = vpop.permute.xlu0 %1187
    %1189 = vrot.lane.b32.xlu0 %v1088, 125
    %v1190 = vpop.permute.xlu0 %1189
    %vm1191 = vcmask 1022976
    %v1192 = vsel %vm1191, %v1184, %v1186
    %v1193 = vsel %vm1191, %v1186, %v1188
    %v1194 = vsel %vm1191, %v1188, %v1190
    %v1200 = vsel %vm1191, %v1190, %v1184
    %v1201 = vpack.c.bf16 %v1128, %v1110
    %v1202 = vpack.c.bf16 %v1121, %v1103
    %v1203 = vpack.c.bf16 %v1122, %v1104
    %v1204 = vpack.c.bf16 %v1123, %v1105
    %v1205 = vpack.c.bf16 %v1084, %v1146
    %v1206 = vpack.c.bf16 %v1086, %v1139
    %v1207 = vpack.c.bf16 %v1087, %v1140
    %v1208 = vpack.c.bf16 %v1088, %v1141
    %v1209 = vpack.c.bf16 %v1174, %v1156
    %v1210 = vpack.c.bf16 %v1175, %v1157
    %v1211 = vpack.c.bf16 %v1176, %v1158
    %v1212 = vpack.c.bf16 %v1182, %v1164
    %v1213 = vpack.c.bf16 %v1192, %v1192
    %v1214 = vpack.c.bf16 %v1193, %v1193
    %v1215 = vpack.c.bf16 %v1194, %v1194
    %v1216 = vpack.c.bf16 %v1200, %v1200
    %1218 = vset.pattern.permute.xlu0 0
    %1219 = vperm.xlu0 %1218, %v175
    %v1220 = vpop.permute.xlu0 %1219
    %1223 = vset.pattern.permute.xlu0 0
    %1224 = vperm.xlu0 %1223, %v176
    %v1225 = vpop.permute.xlu0 %1224
    %1228 = vset.pattern.permute.xlu0 0
    %1229 = vperm.xlu0 %1228, %v177
    %v1230 = vpop.permute.xlu0 %1229
    %1233 = vset.pattern.permute.xlu0 0
    %1234 = vperm.xlu0 %1233, %v178
    %v1235 = vpop.permute.xlu0 %1234
    %1238 = vset.pattern.permute.xlu0 0
    %1239 = vperm.xlu0 %1238, %v179
    %v1240 = vpop.permute.xlu0 %1239
    %1243 = vset.pattern.permute.xlu0 0
    %1244 = vperm.xlu0 %1243, %v180
    %v1245 = vpop.permute.xlu0 %1244
    %1248 = vset.pattern.permute.xlu0 0
    %1249 = vperm.xlu0 %1248, %v181
    %v1250 = vpop.permute.xlu0 %1249
    %1253 = vset.pattern.permute.xlu0 0
    %1254 = vperm.xlu0 %1253, %v182
    %v1255 = vpop.permute.xlu0 %1254
    %1258 = vset.pattern.permute.xlu0 0
    %1259 = vperm.xlu0 %1258, %v183
    %v1260 = vpop.permute.xlu0 %1259
    %1263 = vset.pattern.permute.xlu0 0
    %1264 = vperm.xlu0 %1263, %v184
    %v1265 = vpop.permute.xlu0 %1264
    %1268 = vset.pattern.permute.xlu0 0
    %1269 = vperm.xlu0 %1268, %v185
    %v1270 = vpop.permute.xlu0 %1269
    %1273 = vset.pattern.permute.xlu0 0
    %1274 = vperm.xlu0 %1273, %v186
    %v1275 = vpop.permute.xlu0 %1274
    %1278 = vset.pattern.permute.xlu0 0
    %1279 = vperm.xlu0 %1278, %v187
    %v1280 = vpop.permute.xlu0 %1279
    %1283 = vset.pattern.permute.xlu0 0
    %1284 = vperm.xlu0 %1283, %v188
    %v1285 = vpop.permute.xlu0 %1284
    %1288 = vset.pattern.permute.xlu0 0
    %1289 = vperm.xlu0 %1288, %v189
    %v1290 = vpop.permute.xlu0 %1289
    %1293 = vset.pattern.permute.xlu0 0
    %1294 = vperm.xlu0 %1293, %v190
    %v1295 = vpop.permute.xlu0 %1294
    %v1313 = vunpack.c.l.b16 %v159
    %v1314 = vunpack.c.l.b16 %v160
    %v1315 = vunpack.c.l.b16 %v161
    %v1316 = vunpack.c.l.b16 %v162
    %v1317 = vunpack.c.l.b16 %v163
    %v1318 = vunpack.c.l.b16 %v164
    %v1319 = vunpack.c.l.b16 %v165
    %v1320 = vunpack.c.l.b16 %v166
    %v1321 = vunpack.c.l.b16 %v167
    %v1322 = vunpack.c.l.b16 %v168
    %v1323 = vunpack.c.l.b16 %v169
    %v1324 = vunpack.c.l.b16 %v170
    %v1325 = vunpack.c.l.b16 %v171
    %v1326 = vunpack.c.l.b16 %v172
    %v1327 = vunpack.c.l.b16 %v173
    %v1328 = vunpack.c.l.b16 %v174
    %v1329 = vpack.c.b16 %v1314, %v1313
    %v1330 = vpack.c.b16 %v1316, %v1315
    %v1331 = vpack.c.b16 %v1318, %v1317
    %v1332 = vpack.c.b16 %v1320, %v1319
    %v1333 = vpack.c.b16 %v1322, %v1321
    %v1334 = vpack.c.b16 %v1324, %v1323
    %v1335 = vpack.c.b16 %v1326, %v1325
    %v1336 = vpack.c.b16 %v1328, %v1327
    %vm1337 = vcmask 457728
    %v1339 = vsel %vm1337, %v1329, 0
    %v1342 = vsel %vm1337, %v1330, 0
    %v1345 = vsel %vm1337, %v1331, 0
    %v1348 = vsel %vm1337, %v1332, 0
    %v1351 = vsel %vm1337, %v1333, 0
    %v1354 = vsel %vm1337, %v1334, 0
    %v1357 = vsel %vm1337, %v1335, 0
    %v1360 = vsel %vm1337, %v1336, 0
    %vm1362 = vcmask 1043456
    %v1364 = vsel %vm1362, %v1213, 0
    %v1367 = vsel %vm1362, %v1214, 0
    %v1370 = vsel %vm1362, %v1215, 0
    %v1373 = vsel %vm1362, %v1216, 0
    %1375 = vmatprep.subr.bf16.mxu0 %v1202
    %1376 = vmatpush1.bf16.msra.mxu0 %v1201
    %1377 = vmatprep.subr.bf16.mxu0 %v1206
    %1378 = vmatpush1.bf16.msra.mxu0 %v1205
    %1379 = vmatprep.subr.bf16.mxu0 %v1210
    %1380 = vmatpush1.bf16.msra.mxu0 %v1209
    %1381 = vmatprep.subr.bf16.mxu0 %v1367
    %1382 = vmatpush1.bf16.msra.mxu0 %v1364
    %1383 = vmatprep.subr.bf16.mxu0 0
    %1384 = vmatpush1.bf16.msra.mxu0 0
    %1385 = vmatprep.subr.bf16.mxu0 0
    %1386 = vmatpush1.bf16.msra.mxu0 0
    %1387 = vmatprep.subr.bf16.mxu0 0
    %1388 = vmatpush1.bf16.msra.mxu0 0
    %1389 = vmatprep.subr.bf16.mxu0 0
    %1390 = vmatpush1.bf16.msra.mxu0 0
    %1391 = vmatprep.subr.bf16.mxu0 0
    %1392 = vmatpush1.bf16.msra.mxu0 0
    %1393 = vmatprep.subr.bf16.mxu0 0
    %1394 = vmatpush1.bf16.msra.mxu0 0
    %1395 = vmatprep.subr.bf16.mxu0 0
    %1396 = vmatpush1.bf16.msra.mxu0 0
    %1397 = vmatprep.subr.bf16.mxu0 0
    %1398 = vmatpush1.bf16.msra.mxu0 0
    %1399 = vmatprep.subr.bf16.mxu0 0
    %1400 = vmatpush1.bf16.msra.mxu0 0
    %1401 = vmatprep.subr.bf16.mxu0 0
    %1402 = vmatpush1.bf16.msra.mxu0 0
    %1403 = vmatprep.subr.bf16.mxu0 0
    %1404 = vmatpush1.bf16.msra.mxu0 0
    %1405 = vmatprep.subr.bf16.mxu0 0
    %1406 = vmatpush1.bf16.msra.mxu0 0
    %1407 = vmatprep.mubr.bf16.mxu0 0
    %1408 = vmatmul.mubr.bf16.gmra.mrb[0].mxu0 %v1339
    %v1409 = vpop.f32.mrb[0].mxu0
    %v1410 = vadd.f32 %v1220, %v1409
    %v1411 = vpop.f32.mrb[0].mxu0
    %v1412 = vadd.f32 %v1220, %v1411
    %v1413 = vpop.f32.mrb[0].mxu0
    %v1414 = vadd.f32 %v1225, %v1413
    %v1415 = vpop.f32.mrb[0].mxu0
    %v1416 = vadd.f32 %v1225, %v1415
    %1417 = vmatprep.mubr.bf16.mxu0 0
    %1418 = vmatmul.mubr.bf16.gmra.mrb[0].mxu0 %v1342
    %v1419 = vpop.f32.mrb[0].mxu0
    %v1420 = vadd.f32 %v1230, %v1419
    %v1421 = vpop.f32.mrb[0].mxu0
    %v1422 = vadd.f32 %v1230, %v1421
    %v1423 = vpop.f32.mrb[0].mxu0
    %v1424 = vadd.f32 %v1235, %v1423
    %v1425 = vpop.f32.mrb[0].mxu0
    %v1426 = vadd.f32 %v1235, %v1425
    %1427 = vmatprep.mubr.bf16.mxu0 0
    %1428 = vmatmul.mubr.bf16.gmra.mrb[0].mxu0 %v1345
    %v1429 = vpop.f32.mrb[0].mxu0
    %v1430 = vadd.f32 %v1240, %v1429
    %v1431 = vpop.f32.mrb[0].mxu0
    %v1432 = vadd.f32 %v1240, %v1431
    %v1433 = vpop.f32.mrb[0].mxu0
    %v1434 = vadd.f32 %v1245, %v1433
    %v1435 = vpop.f32.mrb[0].mxu0
    %v1436 = vadd.f32 %v1245, %v1435
    %1437 = vmatprep.mubr.bf16.mxu0 0
    %1438 = vmatmul.mubr.bf16.gmra.mrb[0].mxu0 %v1348
    %v1439 = vpop.f32.mrb[0].mxu0
    %v1440 = vadd.f32 %v1250, %v1439
    %v1441 = vpop.f32.mrb[0].mxu0
    %v1442 = vadd.f32 %v1250, %v1441
    %v1443 = vpop.f32.mrb[0].mxu0
    %v1444 = vadd.f32 %v1255, %v1443
    %v1445 = vpop.f32.mrb[0].mxu0
    %v1446 = vadd.f32 %v1255, %v1445
    %1447 = vmatprep.mubr.bf16.mxu0 0
    %1448 = vmatmul.mubr.bf16.gmra.mrb[0].mxu0 %v1351
    %v1449 = vpop.f32.mrb[0].mxu0
    %v1450 = vadd.f32 %v1260, %v1449
    %v1451 = vpop.f32.mrb[0].mxu0
    %v1452 = vadd.f32 %v1260, %v1451
    %v1453 = vpop.f32.mrb[0].mxu0
    %v1454 = vadd.f32 %v1265, %v1453
    %v1455 = vpop.f32.mrb[0].mxu0
    %v1456 = vadd.f32 %v1265, %v1455
    %1457 = vmatprep.mubr.bf16.mxu0 0
    %1458 = vmatmul.mubr.bf16.gmra.mrb[0].mxu0 %v1354
    %v1459 = vpop.f32.mrb[0].mxu0
    %v1460 = vadd.f32 %v1270, %v1459
    %v1461 = vpop.f32.mrb[0].mxu0
    %v1462 = vadd.f32 %v1270, %v1461
    %v1463 = vpop.f32.mrb[0].mxu0
    %v1464 = vadd.f32 %v1275, %v1463
    %v1465 = vpop.f32.mrb[0].mxu0
    %v1466 = vadd.f32 %v1275, %v1465
    %1467 = vmatprep.mubr.bf16.mxu0 0
    %1468 = vmatmul.mubr.bf16.gmra.mrb[0].mxu0 %v1357
    %v1469 = vpop.f32.mrb[0].mxu0
    %v1470 = vadd.f32 %v1280, %v1469
    %v1471 = vpop.f32.mrb[0].mxu0
    %v1472 = vadd.f32 %v1280, %v1471
    %v1473 = vpop.f32.mrb[0].mxu0
    %v1474 = vadd.f32 %v1285, %v1473
    %v1475 = vpop.f32.mrb[0].mxu0
    %v1476 = vadd.f32 %v1285, %v1475
    %1477 = vmatprep.mubr.bf16.mxu0 0
    %1478 = vmatmul.mubr.bf16.gmra.mrb[0].mxu0 %v1360
    %v1479 = vpop.f32.mrb[0].mxu0
    %v1480 = vadd.f32 %v1290, %v1479
    %v1481 = vpop.f32.mrb[0].mxu0
    %v1482 = vadd.f32 %v1290, %v1481
    %v1483 = vpop.f32.mrb[0].mxu0
    %v1484 = vadd.f32 %v1295, %v1483
    %v1485 = vpop.f32.mrb[0].mxu0
    %v1486 = vadd.f32 %v1295, %v1485
    %1487 = vdwg.mxu0
    %1488 = vmatprep.subr.bf16.mxu0 %v1204
    %1489 = vmatpush1.bf16.msra.mxu0 %v1203
    %1490 = vmatprep.subr.bf16.mxu0 %v1208
    %1491 = vmatpush1.bf16.msra.mxu0 %v1207
    %1492 = vmatprep.subr.bf16.mxu0 %v1212
    %1493 = vmatpush1.bf16.msra.mxu0 %v1211
    %1494 = vmatprep.subr.bf16.mxu0 %v1373
    %1495 = vmatpush1.bf16.msra.mxu0 %v1370
    %1496 = vmatprep.subr.bf16.mxu0 0
    %1497 = vmatpush1.bf16.msra.mxu0 0
    %1498 = vmatprep.subr.bf16.mxu0 0
    %1499 = vmatpush1.bf16.msra.mxu0 0
    %1500 = vmatprep.subr.bf16.mxu0 0
    %1501 = vmatpush1.bf16.msra.mxu0 0
    %1502 = vmatprep.subr.bf16.mxu0 0
    %1503 = vmatpush1.bf16.msra.mxu0 0
    %1504 = vmatprep.subr.bf16.mxu0 0
    %1505 = vmatpush1.bf16.msra.mxu0 0
    %1506 = vmatprep.subr.bf16.mxu0 0
    %1507 = vmatpush1.bf16.msra.mxu0 0
    %1508 = vmatprep.subr.bf16.mxu0 0
    %1509 = vmatpush1.bf16.msra.mxu0 0
    %1510 = vmatprep.subr.bf16.mxu0 0
    %1511 = vmatpush1.bf16.msra.mxu0 0
    %1512 = vmatprep.subr.bf16.mxu0 0
    %1513 = vmatpush1.bf16.msra.mxu0 0
    %1514 = vmatprep.subr.bf16.mxu0 0
    %1515 = vmatpush1.bf16.msra.mxu0 0
    %1516 = vmatprep.subr.bf16.mxu0 0
    %1517 = vmatpush1.bf16.msra.mxu0 0
    %1518 = vmatprep.subr.bf16.mxu0 0
    %1519 = vmatpush1.bf16.msra.mxu0 0
    %1520 = vmatprep.mubr.bf16.mxu0 0
    %1521 = vmatmul.mubr.bf16.gmra.mrb[0].mxu0 %v1339
    %v1522 = vpop.f32.mrb[0].mxu0
    %v1523 = vadd.f32 %v1220, %v1522
    %v1524 = vpop.f32.mrb[0].mxu0
    %v1525 = vadd.f32 %v1220, %v1524
    %v1526 = vpop.f32.mrb[0].mxu0
    %v1527 = vadd.f32 %v1225, %v1526
    %v1528 = vpop.f32.mrb[0].mxu0
    %v1529 = vadd.f32 %v1225, %v1528
    %1530 = vmatprep.mubr.bf16.mxu0 0
    %1531 = vmatmul.mubr.bf16.gmra.mrb[0].mxu0 %v1342
    %v1532 = vpop.f32.mrb[0].mxu0
    %v1533 = vadd.f32 %v1230, %v1532
    %v1534 = vpop.f32.mrb[0].mxu0
    %v1535 = vadd.f32 %v1230, %v1534
    %v1536 = vpop.f32.mrb[0].mxu0
    %v1537 = vadd.f32 %v1235, %v1536
    %v1538 = vpop.f32.mrb[0].mxu0
    %v1539 = vadd.f32 %v1235, %v1538
    %1540 = vmatprep.mubr.bf16.mxu0 0
    %1541 = vmatmul.mubr.bf16.gmra.mrb[0].mxu0 %v1345
    %v1542 = vpop.f32.mrb[0].mxu0
    %v1543 = vadd.f32 %v1240, %v1542
    %v1544 = vpop.f32.mrb[0].mxu0
    %v1545 = vadd.f32 %v1240, %v1544
    %v1546 = vpop.f32.mrb[0].mxu0
    %v1547 = vadd.f32 %v1245, %v1546
    %v1548 = vpop.f32.mrb[0].mxu0
    %v1549 = vadd.f32 %v1245, %v1548
    %1550 = vmatprep.mubr.bf16.mxu0 0
    %1551 = vmatmul.mubr.bf16.gmra.mrb[0].mxu0 %v1348
    %v1552 = vpop.f32.mrb[0].mxu0
    %v1553 = vadd.f32 %v1250, %v1552
    %v1554 = vpop.f32.mrb[0].mxu0
    %v1555 = vadd.f32 %v1250, %v1554
    %v1556 = vpop.f32.mrb[0].mxu0
    %v1557 = vadd.f32 %v1255, %v1556
    %v1558 = vpop.f32.mrb[0].mxu0
    %v1559 = vadd.f32 %v1255, %v1558
    %1560 = vmatprep.mubr.bf16.mxu0 0
    %1561 = vmatmul.mubr.bf16.gmra.mrb[0].mxu0 %v1351
    %v1562 = vpop.f32.mrb[0].mxu0
    %v1563 = vadd.f32 %v1260, %v1562
    %v1564 = vpop.f32.mrb[0].mxu0
    %v1565 = vadd.f32 %v1260, %v1564
    %v1566 = vpop.f32.mrb[0].mxu0
    %v1567 = vadd.f32 %v1265, %v1566
    %v1568 = vpop.f32.mrb[0].mxu0
    %v1569 = vadd.f32 %v1265, %v1568
    %1570 = vmatprep.mubr.bf16.mxu0 0
    %1571 = vmatmul.mubr.bf16.gmra.mrb[0].mxu0 %v1354
    %v1572 = vpop.f32.mrb[0].mxu0
    %v1573 = vadd.f32 %v1270, %v1572
    %v1574 = vpop.f32.mrb[0].mxu0
    %v1575 = vadd.f32 %v1270, %v1574
    %v1576 = vpop.f32.mrb[0].mxu0
    %v1577 = vadd.f32 %v1275, %v1576
    %v1578 = vpop.f32.mrb[0].mxu0
    %v1579 = vadd.f32 %v1275, %v1578
    %1580 = vmatprep.mubr.bf16.mxu0 0
    %1581 = vmatmul.mubr.bf16.gmra.mrb[0].mxu0 %v1357
    %v1582 = vpop.f32.mrb[0].mxu0
    %v1583 = vadd.f32 %v1280, %v1582
    %v1584 = vpop.f32.mrb[0].mxu0
    %v1585 = vadd.f32 %v1280, %v1584
    %v1586 = vpop.f32.mrb[0].mxu0
    %v1587 = vadd.f32 %v1285, %v1586
    %v1588 = vpop.f32.mrb[0].mxu0
    %v1589 = vadd.f32 %v1285, %v1588
    %1590 = vmatprep.mubr.bf16.mxu0 0
    %1591 = vmatmul.mubr.bf16.gmra.mrb[0].mxu0 %v1360
    %v1592 = vpop.f32.mrb[0].mxu0
    %v1593 = vadd.f32 %v1290, %v1592
    %v1594 = vpop.f32.mrb[0].mxu0
    %v1595 = vadd.f32 %v1290, %v1594
    %v1596 = vpop.f32.mrb[0].mxu0
    %v1597 = vadd.f32 %v1295, %v1596
    %v1598 = vpop.f32.mrb[0].mxu0
    %v1599 = vadd.f32 %v1295, %v1598
    %1600 = vdwg.mxu0
    %v1601 = vmax.f32 %v1410, 0.0
    %v1602 = vmax.f32 %v1412, 0.0
    %v1603 = vmax.f32 %v1523, 0.0
    %v1604 = vmax.f32 %v1525, 0.0
    %v1605 = vmax.f32 %v1414, 0.0
    %v1606 = vmax.f32 %v1416, 0.0
    %v1607 = vmax.f32 %v1527, 0.0
    %v1608 = vmax.f32 %v1529, 0.0
    %v1609 = vmax.f32 %v1420, 0.0
    %v1610 = vmax.f32 %v1422, 0.0
    %v1611 = vmax.f32 %v1533, 0.0
    %v1612 = vmax.f32 %v1535, 0.0
    %v1613 = vmax.f32 %v1424, 0.0
    %v1614 = vmax.f32 %v1426, 0.0
    %v1615 = vmax.f32 %v1537, 0.0
    %v1616 = vmax.f32 %v1539, 0.0
    %v1617 = vmax.f32 %v1430, 0.0
    %v1618 = vmax.f32 %v1432, 0.0
    %v1619 = vmax.f32 %v1543, 0.0
    %v1620 = vmax.f32 %v1545, 0.0
    %v1621 = vmax.f32 %v1434, 0.0
    %v1622 = vmax.f32 %v1436, 0.0
    %v1623 = vmax.f32 %v1547, 0.0
    %v1624 = vmax.f32 %v1549, 0.0
    %v1625 = vmax.f32 %v1440, 0.0
    %v1626 = vmax.f32 %v1442, 0.0
    %v1627 = vmax.f32 %v1553, 0.0
    %v1628 = vmax.f32 %v1555, 0.0
    %v1629 = vmax.f32 %v1444, 0.0
    %v1630 = vmax.f32 %v1446, 0.0
    %v1631 = vmax.f32 %v1557, 0.0
    %v1632 = vmax.f32 %v1559, 0.0
    %v1633 = vmax.f32 %v1450, 0.0
    %v1634 = vmax.f32 %v1452, 0.0
    %v1635 = vmax.f32 %v1563, 0.0
    %v1636 = vmax.f32 %v1565, 0.0
    %v1637 = vmax.f32 %v1454, 0.0
    %v1638 = vmax.f32 %v1456, 0.0
    %v1639 = vmax.f32 %v1567, 0.0
    %v1640 = vmax.f32 %v1569, 0.0
    %v1641 = vmax.f32 %v1460, 0.0
    %v1642 = vmax.f32 %v1462, 0.0
    %v1643 = vmax.f32 %v1573, 0.0
    %v1644 = vmax.f32 %v1575, 0.0
    %v1645 = vmax.f32 %v1464, 0.0
    %v1646 = vmax.f32 %v1466, 0.0
    %v1647 = vmax.f32 %v1577, 0.0
    %v1648 = vmax.f32 %v1579, 0.0
    %v1649 = vmax.f32 %v1470, 0.0
    %v1650 = vmax.f32 %v1472, 0.0
    %v1651 = vmax.f32 %v1583, 0.0
    %v1652 = vmax.f32 %v1585, 0.0
    %v1653 = vmax.f32 %v1474, 0.0
    %v1654 = vmax.f32 %v1476, 0.0
    %v1655 = vmax.f32 %v1587, 0.0
    %v1656 = vmax.f32 %v1589, 0.0
    %v1657 = vmax.f32 %v1480, 0.0
    %v1658 = vmax.f32 %v1482, 0.0
    %v1659 = vmax.f32 %v1593, 0.0
    %v1660 = vmax.f32 %v1595, 0.0
    %v1661 = vmax.f32 %v1484, 0.0
    %v1662 = vmax.f32 %v1486, 0.0
    %v1663 = vmax.f32 %v1597, 0.0
    %v1664 = vmax.f32 %v1599, 0.0
    %v1665 = vmax.f32 %v1601, %v1605
    %v1666 = vmax.f32 %v1665, %v1609
    %v1667 = vmax.f32 %v1666, %v1613
    %v1668 = vmax.f32 %v1667, %v1617
    %v1669 = vmax.f32 %v1668, %v1621
    %v1670 = vmax.f32 %v1669, %v1625
    %v1671 = vmax.f32 %v1670, %v1629
    %v1672 = vmax.f32 %v1671, %v1633
    %v1673 = vmax.f32 %v1672, %v1637
    %v1674 = vmax.f32 %v1673, %v1641
    %v1675 = vmax.f32 %v1674, %v1645
    %v1676 = vmax.f32 %v1675, %v1649
    %v1677 = vmax.f32 %v1676, %v1653
    %v1678 = vmax.f32 %v1677, %v1657
    %v1679 = vmax.f32 %v1678, %v1661
    %v1680 = vrot.slane %v1679, 4
    %v1681 = vmax.f32 %v1679, %v1680
    %v1682 = vrot.slane %v1681, 2
    %v1683 = vmax.f32 %v1681, %v1682
    %v1684 = vrot.slane %v1683, 1
    %v1685 = vmax.f32 %v1683, %v1684
    %v1686 = vmax.f32 %v1602, %v1606
    %v1687 = vmax.f32 %v1686, %v1610
    %v1688 = vmax.f32 %v1687, %v1614
    %v1689 = vmax.f32 %v1688, %v1618
    %v1690 = vmax.f32 %v1689, %v1622
    %v1691 = vmax.f32 %v1690, %v1626
    %v1692 = vmax.f32 %v1691, %v1630
    %v1693 = vmax.f32 %v1692, %v1634
    %v1694 = vmax.f32 %v1693, %v1638
    %v1695 = vmax.f32 %v1694, %v1642
    %v1696 = vmax.f32 %v1695, %v1646
    %v1697 = vmax.f32 %v1696, %v1650
    %v1698 = vmax.f32 %v1697, %v1654
    %v1699 = vmax.f32 %v1698, %v1658
    %v1700 = vmax.f32 %v1699, %v1662
    %v1701 = vrot.slane %v1700, 4
    %v1702 = vmax.f32 %v1700, %v1701
    %v1703 = vrot.slane %v1702, 2
    %v1704 = vmax.f32 %v1702, %v1703
    %v1705 = vrot.slane %v1704, 1
    %v1706 = vmax.f32 %v1704, %v1705
    %v1707 = vmax.f32 %v1603, %v1607
    %v1708 = vmax.f32 %v1707, %v1611
    %v1709 = vmax.f32 %v1708, %v1615
    %v1710 = vmax.f32 %v1709, %v1619
    %v1711 = vmax.f32 %v1710, %v1623
    %v1712 = vmax.f32 %v1711, %v1627
    %v1713 = vmax.f32 %v1712, %v1631
    %v1714 = vmax.f32 %v1713, %v1635
    %v1715 = vmax.f32 %v1714, %v1639
    %v1716 = vmax.f32 %v1715, %v1643
    %v1717 = vmax.f32 %v1716, %v1647
    %v1718 = vmax.f32 %v1717, %v1651
    %v1719 = vmax.f32 %v1718, %v1655
    %v1720 = vmax.f32 %v1719, %v1659
    %v1721 = vmax.f32 %v1720, %v1663
    %v1722 = vrot.slane %v1721, 4
    %v1723 = vmax.f32 %v1721, %v1722
    %v1724 = vrot.slane %v1723, 2
    %v1725 = vmax.f32 %v1723, %v1724
    %v1726 = vrot.slane %v1725, 1
    %v1727 = vmax.f32 %v1725, %v1726
    %v1728 = vmax.f32 %v1604, %v1608
    %v1729 = vmax.f32 %v1728, %v1612
    %v1730 = vmax.f32 %v1729, %v1616
    %v1731 = vmax.f32 %v1730, %v1620
    %v1732 = vmax.f32 %v1731, %v1624
    %v1733 = vmax.f32 %v1732, %v1628
    %v1734 = vmax.f32 %v1733, %v1632
    %v1735 = vmax.f32 %v1734, %v1636
    %v1736 = vmax.f32 %v1735, %v1640
    %v1737 = vmax.f32 %v1736, %v1644
    %v1738 = vmax.f32 %v1737, %v1648
    %v1739 = vmax.f32 %v1738, %v1652
    %v1740 = vmax.f32 %v1739, %v1656
    %v1741 = vmax.f32 %v1740, %v1660
    %v1742 = vmax.f32 %v1741, %v1664
    %v1743 = vrot.slane %v1742, 4
    %v1744 = vmax.f32 %v1742, %v1743
    %v1745 = vrot.slane %v1744, 2
    %v1746 = vmax.f32 %v1744, %v1745
    %v1747 = vrot.slane %v1746, 1
    %v1748 = vmax.f32 %v1746, %v1747
    %v1749 = vsel %vm277, %v1685, %v1727
    %v1750 = vsel %vm277, %v1706, %v1748
    %v1751 = vpack.c.bf16 %v1749, %v1749
    %v1752 = vpack.c.bf16 %v1750, %v1750
    %v1754 = vlaneseq
    %v1755 = vshrl.u32 %v1754, 7
    %v1756 = vsub.s32 0, %v1755
    %v1757 = vrot.slane %v223, %v1756
    %v1791 = vunpack.c.l.b16 %v191
    %v1792 = vunpack.c.l.b16 %v192
    %v1793 = vunpack.c.l.b16 %v193
    %v1794 = vunpack.c.l.b16 %v194
    %v1795 = vunpack.c.l.b16 %v195
    %v1796 = vunpack.c.l.b16 %v196
    %v1797 = vunpack.c.l.b16 %v197
    %v1798 = vunpack.c.l.b16 %v198
    %v1799 = vunpack.c.l.b16 %v199
    %v1800 = vunpack.c.l.b16 %v200
    %v1801 = vunpack.c.l.b16 %v201
    %v1802 = vunpack.c.l.b16 %v202
    %v1803 = vunpack.c.l.b16 %v203
    %v1804 = vunpack.c.l.b16 %v204
    %v1805 = vunpack.c.l.b16 %v205
    %v1806 = vunpack.c.l.b16 %v206
    %v1807 = vunpack.c.l.b16 %v207
    %v1808 = vunpack.c.l.b16 %v208
    %v1809 = vunpack.c.l.b16 %v209
    %v1810 = vunpack.c.l.b16 %v210
    %v1811 = vunpack.c.l.b16 %v211
    %v1812 = vunpack.c.l.b16 %v212
    %v1813 = vunpack.c.l.b16 %v213
    %v1814 = vunpack.c.l.b16 %v214
    %v1815 = vunpack.c.l.b16 %v215
    %v1816 = vunpack.c.l.b16 %v216
    %v1817 = vunpack.c.l.b16 %v217
    %v1818 = vunpack.c.l.b16 %v218
    %v1819 = vunpack.c.l.b16 %v219
    %v1820 = vunpack.c.l.b16 %v220
    %v1821 = vunpack.c.l.b16 %v221
    %v1822 = vunpack.c.l.b16 %v222
    %v1823 = vpack.c.b16 %v1792, %v1791
    %v1824 = vpack.c.b16 %v1794, %v1793
    %v1825 = vpack.c.b16 %v1796, %v1795
    %v1826 = vpack.c.b16 %v1798, %v1797
    %v1827 = vpack.c.b16 %v1800, %v1799
    %v1828 = vpack.c.b16 %v1802, %v1801
    %v1829 = vpack.c.b16 %v1804, %v1803
    %v1830 = vpack.c.b16 %v1806, %v1805
    %v1831 = vpack.c.b16 %v1808, %v1807
    %v1832 = vpack.c.b16 %v1810, %v1809
    %v1833 = vpack.c.b16 %v1812, %v1811
    %v1834 = vpack.c.b16 %v1814, %v1813
    %v1835 = vpack.c.b16 %v1816, %v1815
    %v1836 = vpack.c.b16 %v1818, %v1817
    %v1837 = vpack.c.b16 %v1820, %v1819
    %v1838 = vpack.c.b16 %v1822, %v1821
    %1855 = vmatprep.subr.bf16.mxu0 0
    %1856 = vmatpush1.bf16.msra.mxu0 %v1823
    %1857 = vmatprep.subr.bf16.mxu0 0
    %1858 = vmatpush1.bf16.msra.mxu0 %v1824
    %1859 = vmatprep.subr.bf16.mxu0 0
    %1860 = vmatpush1.bf16.msra.mxu0 %v1825
    %1861 = vmatprep.subr.bf16.mxu0 0
    %1862 = vmatpush1.bf16.msra.mxu0 %v1826
    %1863 = vmatprep.subr.bf16.mxu0 0
    %1864 = vmatpush1.bf16.msra.mxu0 %v1827
    %1865 = vmatprep.subr.bf16.mxu0 0
    %1866 = vmatpush1.bf16.msra.mxu0 %v1828
    %1867 = vmatprep.subr.bf16.mxu0 0
    %1868 = vmatpush1.bf16.msra.mxu0 %v1829
    %1869 = vmatprep.subr.bf16.mxu0 0
    %1870 = vmatpush1.bf16.msra.mxu0 %v1830
    %1871 = vmatprep.subr.bf16.mxu0 0
    %1872 = vmatpush1.bf16.msra.mxu0 %v1831
    %1873 = vmatprep.subr.bf16.mxu0 0
    %1874 = vmatpush1.bf16.msra.mxu0 %v1832
    %1875 = vmatprep.subr.bf16.mxu0 0
    %1876 = vmatpush1.bf16.msra.mxu0 %v1833
    %1877 = vmatprep.subr.bf16.mxu0 0
    %1878 = vmatpush1.bf16.msra.mxu0 %v1834
    %1879 = vmatprep.subr.bf16.mxu0 0
    %1880 = vmatpush1.bf16.msra.mxu0 %v1835
    %1881 = vmatprep.subr.bf16.mxu0 0
    %1882 = vmatpush1.bf16.msra.mxu0 %v1836
    %1883 = vmatprep.subr.bf16.mxu0 0
    %1884 = vmatpush1.bf16.msra.mxu0 %v1837
    %1885 = vmatprep.subr.bf16.mxu0 0
    %1886 = vmatpush1.bf16.msra.mxu0 %v1838
    %1887 = vmatprep.mubr.bf16.mxu0 %v1752
    %1888 = vmatmul.mubr.bf16.gmra.mrb[0].mxu0 %v1751
    %v1889 = vpop.f32.mrb[0].mxu0
    %v1890 = vadd.f32 %v1757, %v1889
    %v1891 = vpop.f32.mrb[0].mxu0
    %v1892 = vpop.f32.mrb[0].mxu0
    %v1893 = vpop.f32.mrb[0].mxu0
    %1894 = vdwg.mxu0
    %v1895 = vsub.f32 0.0, %v1890
    %v1896 = vmul.f32 %v1895, 1.442695
    %v1897 = vpow.pop %v1896
    %v1898 = vadd.f32 %v1897, 1.0
    %v1899 = vrcp.pop %v1898
    %v1900 = vmul.f32 1.0, %v1899
    %vm1901 = vcmask 25600
    %1902 = vst.msk [vmem:[#allocation5] sm:$0x3] %vm1901, %v1900
    // Predicated region
    $region46: #{tpu_custom_call.1} parent=1 // pred_check
      _
    $region47: #{tpu_custom_call.1} parent=1 // pred_check_branch
      %1904 = sbr.rel (0) target = $region49
    $region48: #{tpu_custom_call.1} parent=1 // pred_region
      %s1906 = ssub.s32 32, 32
      %1907 = vsyncadd [#allocation4], %s1906
      %s1909 = sshll.u32 [#allocation5], 4
      %s1910 = int_to_ptr.vmem [resolvable:$true] %s1909
      %1912 = dma.vmem_to_hbm [thread:$0]  %s1910, 32, %s10, [#allocation4]
    $region49: #{tpu_custom_call.1} parent=1 // pred_fallthru
      _
    // Predicated region
    $region50: #{tpu_custom_call.1} parent=1 // pred_check
      _
    $region51: #{tpu_custom_call.1} parent=1 // pred_check_branch
      %1914 = sbr.rel (0) target = $region53
    $region52: #{tpu_custom_call.1} parent=1 // pred_region
      %1915 = dma.done [#allocation4], 32
    $region53: #{tpu_custom_call.1} parent=1 // pred_fallthru
      _
    %1916 = vsyncpa [#allocation3], 1
    %1917 = vsyncpa [#allocation4], 1

</llo_original>
